<compile_context>
chip_gen: v7x
topology: tpu7x:2x2x1
jax: 0.10.0
libtpu: 0.0.40
codegen_flags: <defaults>
</compile_context>

<pallas_src>
import functools
import math

import jax
import jax.numpy as jnp
from jax.experimental import pallas as pl
from jax.experimental.pallas import tpu as pltpu


def _encoder_layer_kernel(
    x_ref, mask_ref,
    wq_ref, bq_ref, wk_ref, bk_ref, wv_ref, bv_ref, wo_ref, bo_ref,
    g1_ref, be1_ref,
    w1_ref, b1_ref, w2_ref, b2_ref,
    g2_ref, be2_ref,
    o_ref,
    attn_sc,
    *, n_head: int, eps: float = 1e-12,
):
    bt, S, D = x_ref.shape
    dh = D // n_head
    scale = 1.0 / math.sqrt(dh)
    bf16 = jnp.bfloat16

    # ---- hoisted loads (biases / LN params read exactly once) ------------
    bq = bq_ref[0]
    bk = bk_ref[0]
    bv = bv_ref[0]
    bo = bo_ref[0]
    b1 = b1_ref[0]
    b2 = b2_ref[0]
    g1 = g1_ref[0]
    be1 = be1_ref[0]
    g2 = g2_ref[0]
    be2 = be2_ref[0]

    x_bf = x_ref[...]                            # (bt, S, D) bf16
    rows_bf = x_bf.reshape(bt * S, D)            # bf16 rows for the MXU
    rows_f32 = rows_bf.astype(jnp.float32)       # f32 residual stream

    # Additive mask bias, built + broadcast ONCE (not re-materialized per head).
    mask = mask_ref[...]                         # (bt, 1, S) f32
    neg_bias = jnp.broadcast_to(jnp.where(mask != 0.0, 0.0, -1e9),
                                (bt, S, S))      # (bt, S, S) f32

    def mm(a, w_ref):
        # MXU gets bf16 operands, accumulates in f32.
        return jnp.dot(a.astype(bf16), w_ref[...],
                       preferred_element_type=jnp.float32)

    def layer_norm(y, g, b):
        mu = jnp.mean(y, axis=-1, keepdims=True)
        var = jnp.mean(jnp.square(y - mu), axis=-1, keepdims=True)
        return (y - mu) * jax.lax.rsqrt(var + eps) * g + b

    # ---- Multi-head attention --------------------------------------------
    # Scale folded into q before the bf16 cast; q/k/v live in bf16 across the
    # unrolled head loop (halves their footprint, no per-head casts).
    q = ((mm(rows_bf, wq_ref) + bq) * scale).astype(bf16).reshape(bt, S, D)
    k = (mm(rows_bf, wk_ref) + bk).astype(bf16).reshape(bt, S, D)
    v = (mm(rows_bf, wv_ref) + bv).astype(bf16).reshape(bt, S, D)

    for h in range(n_head):                      # static loop; dh << 128 lanes
        sl = slice(h * dh, (h + 1) * dh)
        qh = q[:, :, sl]                         # (bt, S, dh) bf16
        kh = k[:, :, sl]
        vh = v[:, :, sl]

        s = jnp.einsum("bqd,bkd->bqk", qh, kh,
                       preferred_element_type=jnp.float32)           # (bt, S, S)
        s = s + neg_bias                         # masked keys -> -1e9
        s = s - jnp.max(s, axis=-1, keepdims=True)
        p = jnp.exp(s)
        p = p * pl.reciprocal(jnp.sum(p, axis=-1, keepdims=True), approx=True)

        oh = jnp.einsum("bqk,bkd->bqd", p.astype(bf16), vh,
                        preferred_element_type=jnp.float32)          # (bt, S, dh)
        attn_sc[:, :, sl] = oh.astype(bf16)      # bf16 VMEM scratch

    attn = mm(attn_sc[...].reshape(bt * S, D), wo_ref) + bo          # (bt*S, D) f32

    # ---- Add & Norm 1 (dropout1 = identity at inference) ------------------
    h1 = layer_norm(rows_f32 + attn, g1, be1)
    # TODO(synk): training-mode dropout not implemented (inference identity).

    # ---- Position-wise FFN -------------------------------------------------
    ff = jnp.maximum(mm(h1, w1_ref) + b1, 0.0)                       # (bt*S, d_hidden)
    ff = mm(ff, w2_ref) + b2                                         # (bt*S, D)

    # ---- Add & Norm 2 (dropout2 = identity at inference) ------------------
    out = layer_norm(h1 + ff, g2, be2)
    o_ref[...] = out.reshape(bt, S, D).astype(o_ref.dtype)


def _choose_block_b(B, S, D, d_hidden, n_head, act_budget_bytes):
    """Pick block_b dividing B: largest per-step live set fitting the VMEM budget,
    preferring MXU-friendly row counts (multiples of 256, else 128) and an even
    number of grid steps so both v7x TensorCores stay busy."""
    divisors = [d for d in range(1, B + 1) if B % d == 0]

    def live_bytes(bb):
        rows = bb * S
        return (4 * rows * (6 * D + d_hidden)        # f32 slabs (proj pre-cast, h1, ff, attn, residual)
                + 2 * 4 * bb * S * S                 # f32 score + prob tile (one head live)
                + 3 * 2 * rows * D                   # bf16 q/k/v
                + 2 * rows * D)                      # bf16 attn scratch

    fitting = [d for d in divisors if live_bytes(d) <= act_budget_bytes] or [1]
    best = max(fitting)
    for mult in (256, 128):                          # MXU-friendly M tiles
        cands = [d for d in fitting if (d * S) % mult == 0]
        if cands:
            best = max(cands)
            break
    if (B // best) % 2 == 1:                         # prefer even grid (v7x: 2 TCs)
        evens = [d for d in fitting if d <= best and (B // d) % 2 == 0]
        if evens:
            best = max(evens)
    return best


def encoder_layer(x, mask, params, *, n_head, block_b=None, eps=1e-12):
    B, S, D = x.shape
    d_hidden = params["w1"].shape[1]
    assert D % n_head == 0, "d_model must be divisible by n_head"

    bf16 = jnp.bfloat16
    x_bf = x.astype(bf16)                        # bf16 activations at the boundary
    mask_f = mask.astype(jnp.float32)
    wq = params["wq"].astype(bf16)
    wk = params["wk"].astype(bf16)
    wv = params["wv"].astype(bf16)
    wo = params["wo"].astype(bf16)
    w1 = params["w1"].astype(bf16)
    w2 = params["w2"].astype(bf16)

    # Physical VMEM per TensorCore (v5e/v6e: 128 MiB, v7x: 64 MiB); conservative fallback.
    try:
        phys_vmem = int(pltpu.get_tpu_info().vmem_capacity_bytes)
    except Exception:
        phys_vmem = 64 << 20

    # Resident (single-buffered) weight footprint: bf16 matrices + f32 vectors.
    weight_bytes = 2 * (4 * D * D + 2 * D * d_hidden) + 4 * (8 * D + d_hidden)
    act_budget = max(phys_vmem - weight_bytes - (16 << 20), 4 << 20)

    if block_b is None:
        block_b = _choose_block_b(B, S, D, d_hidden, n_head, act_budget)
    assert B % block_b == 0, "block_b must divide B"
    num_blocks = B // block_b

    # Grid-invariant operands: constant index_map -> single-buffer them.
    def resident(shape):
        return pl.BlockSpec(shape, lambda b: (0,) * len(shape),
                            pipeline_mode=pl.Buffered(1))

    in_specs = [
        pl.BlockSpec((block_b, S, D), lambda b: (b, 0, 0)),   # x (bf16)
        pl.BlockSpec((block_b, 1, S), lambda b: (b, 0, 0)),   # mask (f32)
        resident((D, D)), resident((1, D)),                   # wq, bq
        resident((D, D)), resident((1, D)),                   # wk, bk
        resident((D, D)), resident((1, D)),                   # wv, bv
        resident((D, D)), resident((1, D)),                   # wo, bo
        resident((1, D)), resident((1, D)),                   # gamma1, beta1
        resident((D, d_hidden)), resident((1, d_hidden)),     # w1, b1
        resident((d_hidden, D)), resident((1, D)),            # w2, b2
        resident((1, D)), resident((1, D)),                   # gamma2, beta2
    ]

    # VMEM budget: resident weights + per-step live set (scores included) +
    # double-buffered x/out/mask tiles.  Raise the scoped limit past the
    # smallest per-generation default (v5e: 16 MiB) when needed, clamped below
    # physical VMEM minus headroom (never exceeds v7x's 64 MiB).
    rows = block_b * S
    vmem_est = (weight_bytes
                + 4 * rows * (6 * D + d_hidden)
                + 2 * 4 * block_b * S * S
                + 3 * 2 * rows * D
                + 2 * rows * D
                + 2 * (2 * rows * D + 4 * rows * D + 4 * block_b * S))
    cp_kwargs = dict(dimension_semantics=("parallel",))
    if vmem_est > (16 << 20):
        cp_kwargs["vmem_limit_bytes"] = int(min(vmem_est + (8 << 20),
                                                phys_vmem - (8 << 20)))

    kernel = functools.partial(_encoder_layer_kernel, n_head=n_head, eps=eps)

    return pl.pallas_call(
        kernel,
        out_shape=jax.ShapeDtypeStruct((B, S, D), jnp.float32),
        grid=(num_blocks,),
        in_specs=in_specs,
        out_specs=pl.BlockSpec((block_b, S, D), lambda b: (b, 0, 0)),
        scratch_shapes=[pltpu.VMEM((block_b, S, D), jnp.bfloat16)],
        compiler_params=pltpu.CompilerParams(**cp_kwargs),
    )(
        x_bf, mask_f,
        wq, params["bq"], wk, params["bk"], wv, params["bv"], wo, params["bo"],
        params["gamma1"], params["beta1"],
        w1, params["b1"], w2, params["b2"],
        params["gamma2"], params["beta2"],
    )


def _reference(x, mask, p, n_head, eps=1e-12):
    """Pure-JAX (f32) reference mirroring the PyTorch forward (eval mode)."""
    B, S, D = x.shape
    dh = D // n_head

    def ln(y, g, b):
        mu = jnp.mean(y, -1, keepdims=True)
        var = jnp.mean((y - mu) ** 2, -1, keepdims=True)
        return g[0] * (y - mu) / jnp.sqrt(var + eps) + b[0]

    q = x @ p["wq"] + p["bq"][0]
    k = x @ p["wk"] + p["bk"][0]
    v = x @ p["wv"] + p["bv"][0]
    qh = q.reshape(B, S, n_head, dh).transpose(0, 2, 1, 3)
    kh = k.reshape(B, S, n_head, dh).transpose(0, 2, 1, 3)
    vh = v.reshape(B, S, n_head, dh).transpose(0, 2, 1, 3)
    s = jnp.einsum("bhqd,bhkd->bhqk", qh, kh) / math.sqrt(dh)
    s = jnp.where(mask[:, None, :, :] != 0.0, s, -1e9)
    pr = jax.nn.softmax(s, axis=-1)
    att = jnp.einsum("bhqk,bhkd->bhqd", pr, vh).transpose(0, 2, 1, 3).reshape(B, S, D)
    att = att @ p["wo"] + p["bo"][0]
    h1 = ln(x + att, p["gamma1"], p["beta1"])
    ff = jnp.maximum(h1 @ p["w1"] + p["b1"][0], 0.0) @ p["w2"] + p["b2"][0]
    return ln(h1 + ff, p["gamma2"], p["beta2"])


def _init_params(key, d_model, d_hidden):
    ks = jax.random.split(key, 6)
    s = 0.05
    return {
        "wq": s * jax.random.normal(ks[0], (d_model, d_model), jnp.float32),
        "bq": jnp.zeros((1, d_model), jnp.float32),
        "wk": s * jax.random.normal(ks[1], (d_model, d_model), jnp.float32),
        "bk": jnp.zeros((1, d_model), jnp.float32),
        "wv": s * jax.random.normal(ks[2], (d_model, d_model), jnp.float32),
        "bv": jnp.zeros((1, d_model), jnp.float32),
        "wo": s * jax.random.normal(ks[3], (d_model, d_model), jnp.float32),
        "bo": jnp.zeros((1, d_model), jnp.float32),
        "gamma1": jnp.ones((1, d_model), jnp.float32),
        "beta1": jnp.zeros((1, d_model), jnp.float32),
        "w1": s * jax.random.normal(ks[4], (d_model, d_hidden), jnp.float32),
        "b1": jnp.zeros((1, d_hidden), jnp.float32),
        "w2": s * jax.random.normal(ks[5], (d_hidden, d_model), jnp.float32),
        "b2": jnp.zeros((1, d_model), jnp.float32),
        "gamma2": jnp.ones((1, d_model), jnp.float32),
        "beta2": jnp.zeros((1, d_model), jnp.float32),
    }


if __name__ == "__main__":
    B, S, d_model, n_head, d_hidden = 2, 8, 32, 4, 64

    key = jax.random.PRNGKey(0)
    kx, kp = jax.random.split(key)
    x = jax.random.normal(kx, (B, S, d_model), jnp.float32)

    # mask: 1 = attend, 0 = masked (last two key positions of batch 1 masked out)
    mask = jnp.ones((B, 1, S), jnp.float32)
    mask = mask.at[1, 0, -2:].set(0.0)

    params = _init_params(kp, d_model, d_hidden)

    out = encoder_layer(x, mask, params, n_head=n_head)
    out = jax.block_until_ready(out)

    ref = _reference(x, mask, params, n_head)
    assert out.shape == (B, S, d_model)
    # bf16 MXU operands -> looser tolerance than the pure-f32 reference.
    assert jnp.allclose(out, ref, atol=5e-2, rtol=5e-2), "mismatch vs reference"

    print("KERNEL_OK")
</pallas_src>

<mosaic_0001>
module attributes {stable_mosaic.version = 11 : i64} {
  func.func @_encoder_layer_kernel(%arg0: i32, %arg1: memref<1x8x32xbf16, #tpu.memory_space<vmem>>, %arg2: memref<1x1x8xf32, #tpu.memory_space<vmem>>, %arg3: memref<32x32xbf16, #tpu.memory_space<vmem>>, %arg4: memref<1x32xf32, #tpu.memory_space<vmem>>, %arg5: memref<32x32xbf16, #tpu.memory_space<vmem>>, %arg6: memref<1x32xf32, #tpu.memory_space<vmem>>, %arg7: memref<32x32xbf16, #tpu.memory_space<vmem>>, %arg8: memref<1x32xf32, #tpu.memory_space<vmem>>, %arg9: memref<32x32xbf16, #tpu.memory_space<vmem>>, %arg10: memref<1x32xf32, #tpu.memory_space<vmem>>, %arg11: memref<1x32xf32, #tpu.memory_space<vmem>>, %arg12: memref<1x32xf32, #tpu.memory_space<vmem>>, %arg13: memref<32x64xbf16, #tpu.memory_space<vmem>>, %arg14: memref<1x64xf32, #tpu.memory_space<vmem>>, %arg15: memref<64x32xbf16, #tpu.memory_space<vmem>>, %arg16: memref<1x32xf32, #tpu.memory_space<vmem>>, %arg17: memref<1x32xf32, #tpu.memory_space<vmem>>, %arg18: memref<1x32xf32, #tpu.memory_space<vmem>>, %arg19: memref<1x8x32xf32, #tpu.memory_space<vmem>>, %arg20: memref<1x8x32xbf16, #tpu.memory_space<vmem>>) attributes {dimension_semantics = [#tpu.dimension_semantics<parallel>], iteration_bounds = array<i64: 2>, scalar_prefetch = 0 : i64, scratch_operands = 1 : i64, tpu.core_type = #tpu.core_type<tc>, window_params = [{transform_indices = @transform_0, window_bounds = array<i64: 1, 8, 32>}, {transform_indices = @transform_1, window_bounds = array<i64: 1, 1, 8>}, {pipeline_mode = #tpu.pipeline_mode<synchronous>, transform_indices = @transform_2, window_bounds = array<i64: 32, 32>}, {pipeline_mode = #tpu.pipeline_mode<synchronous>, transform_indices = @transform_3, window_bounds = array<i64: 1, 32>}, {pipeline_mode = #tpu.pipeline_mode<synchronous>, transform_indices = @transform_4, window_bounds = array<i64: 32, 32>}, {pipeline_mode = #tpu.pipeline_mode<synchronous>, transform_indices = @transform_5, window_bounds = array<i64: 1, 32>}, {pipeline_mode = #tpu.pipeline_mode<synchronous>, transform_indices = @transform_6, window_bounds = array<i64: 32, 32>}, {pipeline_mode = #tpu.pipeline_mode<synchronous>, transform_indices = @transform_7, window_bounds = array<i64: 1, 32>}, {pipeline_mode = #tpu.pipeline_mode<synchronous>, transform_indices = @transform_8, window_bounds = array<i64: 32, 32>}, {pipeline_mode = #tpu.pipeline_mode<synchronous>, transform_indices = @transform_9, window_bounds = array<i64: 1, 32>}, {pipeline_mode = #tpu.pipeline_mode<synchronous>, transform_indices = @transform_10, window_bounds = array<i64: 1, 32>}, {pipeline_mode = #tpu.pipeline_mode<synchronous>, transform_indices = @transform_11, window_bounds = array<i64: 1, 32>}, {pipeline_mode = #tpu.pipeline_mode<synchronous>, transform_indices = @transform_12, window_bounds = array<i64: 32, 64>}, {pipeline_mode = #tpu.pipeline_mode<synchronous>, transform_indices = @transform_13, window_bounds = array<i64: 1, 64>}, {pipeline_mode = #tpu.pipeline_mode<synchronous>, transform_indices = @transform_14, window_bounds = array<i64: 64, 32>}, {pipeline_mode = #tpu.pipeline_mode<synchronous>, transform_indices = @transform_15, window_bounds = array<i64: 1, 32>}, {pipeline_mode = #tpu.pipeline_mode<synchronous>, transform_indices = @transform_16, window_bounds = array<i64: 1, 32>}, {pipeline_mode = #tpu.pipeline_mode<synchronous>, transform_indices = @transform_17, window_bounds = array<i64: 1, 32>}, {transform_indices = @transform_18, window_bounds = array<i64: 1, 8, 32>}]} {
    %c0 = arith.constant 0 : index
    %c0_0 = arith.constant 0 : index
    %0 = vector.load %arg4[%c0, %c0_0] : memref<1x32xf32, #tpu.memory_space<vmem>>, vector<1x32xf32>
    %1 = vector.shape_cast %0 : vector<1x32xf32> to vector<32xf32>
    %c0_1 = arith.constant 0 : index
    %c0_2 = arith.constant 0 : index
    %2 = vector.load %arg6[%c0_1, %c0_2] : memref<1x32xf32, #tpu.memory_space<vmem>>, vector<1x32xf32>
    %3 = vector.shape_cast %2 : vector<1x32xf32> to vector<32xf32>
    %c0_3 = arith.constant 0 : index
    %c0_4 = arith.constant 0 : index
    %4 = vector.load %arg8[%c0_3, %c0_4] : memref<1x32xf32, #tpu.memory_space<vmem>>, vector<1x32xf32>
    %5 = vector.shape_cast %4 : vector<1x32xf32> to vector<32xf32>
    %c0_5 = arith.constant 0 : index
    %c0_6 = arith.constant 0 : index
    %6 = vector.load %arg10[%c0_5, %c0_6] : memref<1x32xf32, #tpu.memory_space<vmem>>, vector<1x32xf32>
    %7 = vector.shape_cast %6 : vector<1x32xf32> to vector<32xf32>
    %c0_7 = arith.constant 0 : index
    %c0_8 = arith.constant 0 : index
    %8 = vector.load %arg14[%c0_7, %c0_8] : memref<1x64xf32, #tpu.memory_space<vmem>>, vector<1x64xf32>
    %9 = vector.shape_cast %8 : vector<1x64xf32> to vector<64xf32>
    %c0_9 = arith.constant 0 : index
    %c0_10 = arith.constant 0 : index
    %10 = vector.load %arg16[%c0_9, %c0_10] : memref<1x32xf32, #tpu.memory_space<vmem>>, vector<1x32xf32>
    %11 = vector.shape_cast %10 : vector<1x32xf32> to vector<32xf32>
    %c0_11 = arith.constant 0 : index
    %c0_12 = arith.constant 0 : index
    %12 = vector.load %arg11[%c0_11, %c0_12] : memref<1x32xf32, #tpu.memory_space<vmem>>, vector<1x32xf32>
    %13 = vector.shape_cast %12 : vector<1x32xf32> to vector<32xf32>
    %c0_13 = arith.constant 0 : index
    %c0_14 = arith.constant 0 : index
    %14 = vector.load %arg12[%c0_13, %c0_14] : memref<1x32xf32, #tpu.memory_space<vmem>>, vector<1x32xf32>
    %15 = vector.shape_cast %14 : vector<1x32xf32> to vector<32xf32>
    %c0_15 = arith.constant 0 : index
    %c0_16 = arith.constant 0 : index
    %16 = vector.load %arg17[%c0_15, %c0_16] : memref<1x32xf32, #tpu.memory_space<vmem>>, vector<1x32xf32>
    %17 = vector.shape_cast %16 : vector<1x32xf32> to vector<32xf32>
    %c0_17 = arith.constant 0 : index
    %c0_18 = arith.constant 0 : index
    %18 = vector.load %arg18[%c0_17, %c0_18] : memref<1x32xf32, #tpu.memory_space<vmem>>, vector<1x32xf32>
    %19 = vector.shape_cast %18 : vector<1x32xf32> to vector<32xf32>
    %c0_19 = arith.constant 0 : index
    %c0_20 = arith.constant 0 : index
    %c0_21 = arith.constant 0 : index
    %20 = vector.load %arg1[%c0_19, %c0_20, %c0_21] : memref<1x8x32xbf16, #tpu.memory_space<vmem>>, vector<1x8x32xbf16>
    %21 = vector.shape_cast %20 : vector<1x8x32xbf16> to vector<8x32xbf16>
    %22 = arith.extf %21 : vector<8x32xbf16> to vector<8x32xf32>
    %c0_22 = arith.constant 0 : index
    %c0_23 = arith.constant 0 : index
    %c0_24 = arith.constant 0 : index
    %23 = vector.load %arg2[%c0_22, %c0_23, %c0_24] : memref<1x1x8xf32, #tpu.memory_space<vmem>>, vector<1x1x8xf32>
    %cst = arith.constant 0.000000e+00 : f32
    %24 = vector.broadcast %cst : f32 to vector<1x1x8xf32>
    %25 = arith.cmpf one, %23, %24 : vector<1x1x8xf32>
    %cst_25 = arith.constant 0.000000e+00 : f32
    %cst_26 = arith.constant -1.000000e+09 : f32
    %26 = vector.broadcast %cst_25 : f32 to vector<1x1x8xf32>
    %27 = vector.broadcast %cst_26 : f32 to vector<1x1x8xf32>
    %28 = arith.select %25, %26, %27 : vector<1x1x8xi1>, vector<1x1x8xf32>
    %29 = vector.shape_cast %28 : vector<1x1x8xf32> to vector<1x1x8xf32>
    %30 = vector.broadcast %29 : vector<1x1x8xf32> to vector<1x8x8xf32>
    %c0_27 = arith.constant 0 : index
    %c0_28 = arith.constant 0 : index
    %31 = vector.load %arg3[%c0_27, %c0_28] : memref<32x32xbf16, #tpu.memory_space<vmem>>, vector<32x32xbf16>
    %cst_29 = arith.constant dense<0.000000e+00> : vector<8x32xf32>
    %32 = tpu.matmul %21, %31, %cst_29 {dimension_numbers = #tpu.dot_dimension_numbers<[1], [0], [0], [1], [0, 0, 1, 1], [], []>} : vector<8x32xbf16>, vector<32x32xbf16>, vector<8x32xf32> -> vector<8x32xf32>
    %33 = vector.shape_cast %1 : vector<32xf32> to vector<1x32xf32>
    %34 = vector.broadcast %33 : vector<1x32xf32> to vector<8x32xf32>
    %35 = arith.addf %32, %34 : vector<8x32xf32>
    %cst_30 = arith.constant 0.353553385 : f32
    %36 = vector.broadcast %cst_30 : f32 to vector<8x32xf32>
    %37 = arith.mulf %35, %36 : vector<8x32xf32>
    %38 = arith.truncf %37 : vector<8x32xf32> to vector<8x32xbf16>
    %39 = vector.shape_cast %38 : vector<8x32xbf16> to vector<1x8x32xbf16>
    %c0_31 = arith.constant 0 : index
    %c0_32 = arith.constant 0 : index
    %40 = vector.load %arg5[%c0_31, %c0_32] : memref<32x32xbf16, #tpu.memory_space<vmem>>, vector<32x32xbf16>
    %cst_33 = arith.constant dense<0.000000e+00> : vector<8x32xf32>
    %41 = tpu.matmul %21, %40, %cst_33 {dimension_numbers = #tpu.dot_dimension_numbers<[1], [0], [0], [1], [0, 0, 1, 1], [], []>} : vector<8x32xbf16>, vector<32x32xbf16>, vector<8x32xf32> -> vector<8x32xf32>
    %42 = vector.shape_cast %3 : vector<32xf32> to vector<1x32xf32>
    %43 = vector.broadcast %42 : vector<1x32xf32> to vector<8x32xf32>
    %44 = arith.addf %41, %43 : vector<8x32xf32>
    %45 = arith.truncf %44 : vector<8x32xf32> to vector<8x32xbf16>
    %46 = vector.shape_cast %45 : vector<8x32xbf16> to vector<1x8x32xbf16>
    %c0_34 = arith.constant 0 : index
    %c0_35 = arith.constant 0 : index
    %47 = vector.load %arg7[%c0_34, %c0_35] : memref<32x32xbf16, #tpu.memory_space<vmem>>, vector<32x32xbf16>
    %cst_36 = arith.constant dense<0.000000e+00> : vector<8x32xf32>
    %48 = tpu.matmul %21, %47, %cst_36 {dimension_numbers = #tpu.dot_dimension_numbers<[1], [0], [0], [1], [0, 0, 1, 1], [], []>} : vector<8x32xbf16>, vector<32x32xbf16>, vector<8x32xf32> -> vector<8x32xf32>
    %49 = vector.shape_cast %5 : vector<32xf32> to vector<1x32xf32>
    %50 = vector.broadcast %49 : vector<1x32xf32> to vector<8x32xf32>
    %51 = arith.addf %48, %50 : vector<8x32xf32>
    %52 = arith.truncf %51 : vector<8x32xf32> to vector<8x32xbf16>
    %53 = vector.shape_cast %52 : vector<8x32xbf16> to vector<1x8x32xbf16>
    %54 = vector.extract_strided_slice %39 {offsets = [0, 0, 0], sizes = [1, 8, 8], strides = [1, 1, 1]} : vector<1x8x32xbf16> to vector<1x8x8xbf16>
    %55 = vector.extract_strided_slice %46 {offsets = [0, 0, 0], sizes = [1, 8, 8], strides = [1, 1, 1]} : vector<1x8x32xbf16> to vector<1x8x8xbf16>
    %56 = vector.extract_strided_slice %53 {offsets = [0, 0, 0], sizes = [1, 8, 8], strides = [1, 1, 1]} : vector<1x8x32xbf16> to vector<1x8x8xbf16>
    "tpu.trace_start"() <{level = 10 : i32, message = "bqd,bkd->bqk"}> : () -> ()
    %cst_37 = arith.constant dense<0.000000e+00> : vector<1x8x8xf32>
    %57 = tpu.matmul %54, %55, %cst_37 {dimension_numbers = #tpu.dot_dimension_numbers<[2], [2], [1], [1], [0, 0, 0, 1, 1, 1], [0], [0]>} : vector<1x8x8xbf16>, vector<1x8x8xbf16>, vector<1x8x8xf32> -> vector<1x8x8xf32>
    "tpu.trace_stop"() : () -> ()
    %58 = arith.addf %57, %30 : vector<1x8x8xf32>
    %cst_38 = arith.constant dense<0xFF800000> : vector<1x8xf32>
    %59 = vector.multi_reduction <maximumf>, %58, %cst_38 [2] : vector<1x8x8xf32> to vector<1x8xf32>
    %60 = vector.shape_cast %59 : vector<1x8xf32> to vector<1x8x1xf32>
    %61 = vector.broadcast %60 : vector<1x8x1xf32> to vector<1x8x8xf32>
    %62 = arith.subf %58, %61 : vector<1x8x8xf32>
    %63 = math.exp %62 : vector<1x8x8xf32>
    %cst_39 = arith.constant dense<0.000000e+00> : vector<1x8xf32>
    %64 = vector.multi_reduction <add>, %63, %cst_39 [2] : vector<1x8x8xf32> to vector<1x8xf32>
    %65 = vector.shape_cast %64 : vector<1x8xf32> to vector<1x8x1xf32>
    %66 = tpu.reciprocal %65 {approx = true} : vector<1x8x1xf32> -> vector<1x8x1xf32>
    %67 = vector.broadcast %66 : vector<1x8x1xf32> to vector<1x8x8xf32>
    %68 = arith.mulf %63, %67 : vector<1x8x8xf32>
    %69 = arith.truncf %68 : vector<1x8x8xf32> to vector<1x8x8xbf16>
    "tpu.trace_start"() <{level = 10 : i32, message = "bqk,bkd->bqd"}> : () -> ()
    %cst_40 = arith.constant dense<0.000000e+00> : vector<1x8x8xf32>
    %70 = tpu.matmul %69, %56, %cst_40 {dimension_numbers = #tpu.dot_dimension_numbers<[2], [1], [1], [2], [0, 0, 0, 1, 1, 2], [0], [0]>} : vector<1x8x8xbf16>, vector<1x8x8xbf16>, vector<1x8x8xf32> -> vector<1x8x8xf32>
    "tpu.trace_stop"() : () -> ()
    %71 = arith.truncf %70 : vector<1x8x8xf32> to vector<1x8x8xbf16>
    %c0_41 = arith.constant 0 : index
    %c0_42 = arith.constant 0 : index
    %c0_43 = arith.constant 0 : index
    %72 = vector.load %arg20[%c0_41, %c0_42, %c0_43] : memref<1x8x32xbf16, #tpu.memory_space<vmem>>, vector<1x8x8xbf16>
    tpu.vector_store %arg20[%c0_41, %c0_42, %c0_43], %71 {strides = array<i32>} : memref<1x8x32xbf16, #tpu.memory_space<vmem>>, vector<1x8x8xbf16>,
    %73 = vector.extract_strided_slice %39 {offsets = [0, 0, 8], sizes = [1, 8, 8], strides = [1, 1, 1]} : vector<1x8x32xbf16> to vector<1x8x8xbf16>
    %74 = vector.extract_strided_slice %46 {offsets = [0, 0, 8], sizes = [1, 8, 8], strides = [1, 1, 1]} : vector<1x8x32xbf16> to vector<1x8x8xbf16>
    %75 = vector.extract_strided_slice %53 {offsets = [0, 0, 8], sizes = [1, 8, 8], strides = [1, 1, 1]} : vector<1x8x32xbf16> to vector<1x8x8xbf16>
    "tpu.trace_start"() <{level = 10 : i32, message = "bqd,bkd->bqk"}> : () -> ()
    %cst_44 = arith.constant dense<0.000000e+00> : vector<1x8x8xf32>
    %76 = tpu.matmul %73, %74, %cst_44 {dimension_numbers = #tpu.dot_dimension_numbers<[2], [2], [1], [1], [0, 0, 0, 1, 1, 1], [0], [0]>} : vector<1x8x8xbf16>, vector<1x8x8xbf16>, vector<1x8x8xf32> -> vector<1x8x8xf32>
    "tpu.trace_stop"() : () -> ()
    %77 = arith.addf %76, %30 : vector<1x8x8xf32>
    %cst_45 = arith.constant dense<0xFF800000> : vector<1x8xf32>
    %78 = vector.multi_reduction <maximumf>, %77, %cst_45 [2] : vector<1x8x8xf32> to vector<1x8xf32>
    %79 = vector.shape_cast %78 : vector<1x8xf32> to vector<1x8x1xf32>
    %80 = vector.broadcast %79 : vector<1x8x1xf32> to vector<1x8x8xf32>
    %81 = arith.subf %77, %80 : vector<1x8x8xf32>
    %82 = math.exp %81 : vector<1x8x8xf32>
    %cst_46 = arith.constant dense<0.000000e+00> : vector<1x8xf32>
    %83 = vector.multi_reduction <add>, %82, %cst_46 [2] : vector<1x8x8xf32> to vector<1x8xf32>
    %84 = vector.shape_cast %83 : vector<1x8xf32> to vector<1x8x1xf32>
    %85 = tpu.reciprocal %84 {approx = true} : vector<1x8x1xf32> -> vector<1x8x1xf32>
    %86 = vector.broadcast %85 : vector<1x8x1xf32> to vector<1x8x8xf32>
    %87 = arith.mulf %82, %86 : vector<1x8x8xf32>
    %88 = arith.truncf %87 : vector<1x8x8xf32> to vector<1x8x8xbf16>
    "tpu.trace_start"() <{level = 10 : i32, message = "bqk,bkd->bqd"}> : () -> ()
    %cst_47 = arith.constant dense<0.000000e+00> : vector<1x8x8xf32>
    %89 = tpu.matmul %88, %75, %cst_47 {dimension_numbers = #tpu.dot_dimension_numbers<[2], [1], [1], [2], [0, 0, 0, 1, 1, 2], [0], [0]>} : vector<1x8x8xbf16>, vector<1x8x8xbf16>, vector<1x8x8xf32> -> vector<1x8x8xf32>
    "tpu.trace_stop"() : () -> ()
    %90 = arith.truncf %89 : vector<1x8x8xf32> to vector<1x8x8xbf16>
    %c0_48 = arith.constant 0 : index
    %c0_49 = arith.constant 0 : index
    %c8 = arith.constant 8 : index
    %91 = vector.load %arg20[%c0_48, %c0_49, %c8] : memref<1x8x32xbf16, #tpu.memory_space<vmem>>, vector<1x8x8xbf16>
    tpu.vector_store %arg20[%c0_48, %c0_49, %c8], %90 {strides = array<i32>} : memref<1x8x32xbf16, #tpu.memory_space<vmem>>, vector<1x8x8xbf16>,
    %92 = vector.extract_strided_slice %39 {offsets = [0, 0, 16], sizes = [1, 8, 8], strides = [1, 1, 1]} : vector<1x8x32xbf16> to vector<1x8x8xbf16>
    %93 = vector.extract_strided_slice %46 {offsets = [0, 0, 16], sizes = [1, 8, 8], strides = [1, 1, 1]} : vector<1x8x32xbf16> to vector<1x8x8xbf16>
    %94 = vector.extract_strided_slice %53 {offsets = [0, 0, 16], sizes = [1, 8, 8], strides = [1, 1, 1]} : vector<1x8x32xbf16> to vector<1x8x8xbf16>
    "tpu.trace_start"() <{level = 10 : i32, message = "bqd,bkd->bqk"}> : () -> ()
    %cst_50 = arith.constant dense<0.000000e+00> : vector<1x8x8xf32>
    %95 = tpu.matmul %92, %93, %cst_50 {dimension_numbers = #tpu.dot_dimension_numbers<[2], [2], [1], [1], [0, 0, 0, 1, 1, 1], [0], [0]>} : vector<1x8x8xbf16>, vector<1x8x8xbf16>, vector<1x8x8xf32> -> vector<1x8x8xf32>
    "tpu.trace_stop"() : () -> ()
    %96 = arith.addf %95, %30 : vector<1x8x8xf32>
    %cst_51 = arith.constant dense<0xFF800000> : vector<1x8xf32>
    %97 = vector.multi_reduction <maximumf>, %96, %cst_51 [2] : vector<1x8x8xf32> to vector<1x8xf32>
    %98 = vector.shape_cast %97 : vector<1x8xf32> to vector<1x8x1xf32>
    %99 = vector.broadcast %98 : vector<1x8x1xf32> to vector<1x8x8xf32>
    %100 = arith.subf %96, %99 : vector<1x8x8xf32>
    %101 = math.exp %100 : vector<1x8x8xf32>
    %cst_52 = arith.constant dense<0.000000e+00> : vector<1x8xf32>
    %102 = vector.multi_reduction <add>, %101, %cst_52 [2] : vector<1x8x8xf32> to vector<1x8xf32>
    %103 = vector.shape_cast %102 : vector<1x8xf32> to vector<1x8x1xf32>
    %104 = tpu.reciprocal %103 {approx = true} : vector<1x8x1xf32> -> vector<1x8x1xf32>
    %105 = vector.broadcast %104 : vector<1x8x1xf32> to vector<1x8x8xf32>
    %106 = arith.mulf %101, %105 : vector<1x8x8xf32>
    %107 = arith.truncf %106 : vector<1x8x8xf32> to vector<1x8x8xbf16>
    "tpu.trace_start"() <{level = 10 : i32, message = "bqk,bkd->bqd"}> : () -> ()
    %cst_53 = arith.constant dense<0.000000e+00> : vector<1x8x8xf32>
    %108 = tpu.matmul %107, %94, %cst_53 {dimension_numbers = #tpu.dot_dimension_numbers<[2], [1], [1], [2], [0, 0, 0, 1, 1, 2], [0], [0]>} : vector<1x8x8xbf16>, vector<1x8x8xbf16>, vector<1x8x8xf32> -> vector<1x8x8xf32>
    "tpu.trace_stop"() : () -> ()
    %109 = arith.truncf %108 : vector<1x8x8xf32> to vector<1x8x8xbf16>
    %c0_54 = arith.constant 0 : index
    %c0_55 = arith.constant 0 : index
    %c16 = arith.constant 16 : index
    %110 = vector.load %arg20[%c0_54, %c0_55, %c16] : memref<1x8x32xbf16, #tpu.memory_space<vmem>>, vector<1x8x8xbf16>
    tpu.vector_store %arg20[%c0_54, %c0_55, %c16], %109 {strides = array<i32>} : memref<1x8x32xbf16, #tpu.memory_space<vmem>>, vector<1x8x8xbf16>,
    %111 = vector.extract_strided_slice %39 {offsets = [0, 0, 24], sizes = [1, 8, 8], strides = [1, 1, 1]} : vector<1x8x32xbf16> to vector<1x8x8xbf16>
    %112 = vector.extract_strided_slice %46 {offsets = [0, 0, 24], sizes = [1, 8, 8], strides = [1, 1, 1]} : vector<1x8x32xbf16> to vector<1x8x8xbf16>
    %113 = vector.extract_strided_slice %53 {offsets = [0, 0, 24], sizes = [1, 8, 8], strides = [1, 1, 1]} : vector<1x8x32xbf16> to vector<1x8x8xbf16>
    "tpu.trace_start"() <{level = 10 : i32, message = "bqd,bkd->bqk"}> : () -> ()
    %cst_56 = arith.constant dense<0.000000e+00> : vector<1x8x8xf32>
    %114 = tpu.matmul %111, %112, %cst_56 {dimension_numbers = #tpu.dot_dimension_numbers<[2], [2], [1], [1], [0, 0, 0, 1, 1, 1], [0], [0]>} : vector<1x8x8xbf16>, vector<1x8x8xbf16>, vector<1x8x8xf32> -> vector<1x8x8xf32>
    "tpu.trace_stop"() : () -> ()
    %115 = arith.addf %114, %30 : vector<1x8x8xf32>
    %cst_57 = arith.constant dense<0xFF800000> : vector<1x8xf32>
    %116 = vector.multi_reduction <maximumf>, %115, %cst_57 [2] : vector<1x8x8xf32> to vector<1x8xf32>
    %117 = vector.shape_cast %116 : vector<1x8xf32> to vector<1x8x1xf32>
    %118 = vector.broadcast %117 : vector<1x8x1xf32> to vector<1x8x8xf32>
    %119 = arith.subf %115, %118 : vector<1x8x8xf32>
    %120 = math.exp %119 : vector<1x8x8xf32>
    %cst_58 = arith.constant dense<0.000000e+00> : vector<1x8xf32>
    %121 = vector.multi_reduction <add>, %120, %cst_58 [2] : vector<1x8x8xf32> to vector<1x8xf32>
    %122 = vector.shape_cast %121 : vector<1x8xf32> to vector<1x8x1xf32>
    %123 = tpu.reciprocal %122 {approx = true} : vector<1x8x1xf32> -> vector<1x8x1xf32>
    %124 = vector.broadcast %123 : vector<1x8x1xf32> to vector<1x8x8xf32>
    %125 = arith.mulf %120, %124 : vector<1x8x8xf32>
    %126 = arith.truncf %125 : vector<1x8x8xf32> to vector<1x8x8xbf16>
    "tpu.trace_start"() <{level = 10 : i32, message = "bqk,bkd->bqd"}> : () -> ()
    %cst_59 = arith.constant dense<0.000000e+00> : vector<1x8x8xf32>
    %127 = tpu.matmul %126, %113, %cst_59 {dimension_numbers = #tpu.dot_dimension_numbers<[2], [1], [1], [2], [0, 0, 0, 1, 1, 2], [0], [0]>} : vector<1x8x8xbf16>, vector<1x8x8xbf16>, vector<1x8x8xf32> -> vector<1x8x8xf32>
    "tpu.trace_stop"() : () -> ()
    %128 = arith.truncf %127 : vector<1x8x8xf32> to vector<1x8x8xbf16>
    %c0_60 = arith.constant 0 : index
    %c0_61 = arith.constant 0 : index
    %c24 = arith.constant 24 : index
    %129 = vector.load %arg20[%c0_60, %c0_61, %c24] : memref<1x8x32xbf16, #tpu.memory_space<vmem>>, vector<1x8x8xbf16>
    tpu.vector_store %arg20[%c0_60, %c0_61, %c24], %128 {strides = array<i32>} : memref<1x8x32xbf16, #tpu.memory_space<vmem>>, vector<1x8x8xbf16>,
    %c0_62 = arith.constant 0 : index
    %c0_63 = arith.constant 0 : index
    %c0_64 = arith.constant 0 : index
    %130 = vector.load %arg20[%c0_62, %c0_63, %c0_64] : memref<1x8x32xbf16, #tpu.memory_space<vmem>>, vector<1x8x32xbf16>
    %131 = vector.shape_cast %130 : vector<1x8x32xbf16> to vector<8x32xbf16>
    %c0_65 = arith.constant 0 : index
    %c0_66 = arith.constant 0 : index
    %132 = vector.load %arg9[%c0_65, %c0_66] : memref<32x32xbf16, #tpu.memory_space<vmem>>, vector<32x32xbf16>
    %cst_67 = arith.constant dense<0.000000e+00> : vector<8x32xf32>
    %133 = tpu.matmul %131, %132, %cst_67 {dimension_numbers = #tpu.dot_dimension_numbers<[1], [0], [0], [1], [0, 0, 1, 1], [], []>} : vector<8x32xbf16>, vector<32x32xbf16>, vector<8x32xf32> -> vector<8x32xf32>
    %134 = vector.shape_cast %7 : vector<32xf32> to vector<1x32xf32>
    %135 = vector.broadcast %134 : vector<1x32xf32> to vector<8x32xf32>
    %136 = arith.addf %133, %135 : vector<8x32xf32>
    %137 = arith.addf %22, %136 : vector<8x32xf32>
    %cst_68 = arith.constant dense<0.000000e+00> : vector<8xf32>
    %138 = vector.multi_reduction <add>, %137, %cst_68 [1] : vector<8x32xf32> to vector<8xf32>
    %139 = vector.shape_cast %138 : vector<8xf32> to vector<8x1xf32>
    %cst_69 = arith.constant 3.200000e+01 : f32
    %140 = vector.broadcast %cst_69 : f32 to vector<8x1xf32>
    %141 = arith.divf %139, %140 : vector<8x1xf32>
    %142 = vector.broadcast %141 : vector<8x1xf32> to vector<8x32xf32>
    %143 = arith.subf %137, %142 : vector<8x32xf32>
    %144 = arith.mulf %143, %143 : vector<8x32xf32>
    %cst_70 = arith.constant dense<0.000000e+00> : vector<8xf32>
    %145 = vector.multi_reduction <add>, %144, %cst_70 [1] : vector<8x32xf32> to vector<8xf32>
    %146 = vector.shape_cast %145 : vector<8xf32> to vector<8x1xf32>
    %cst_71 = arith.constant 3.200000e+01 : f32
    %147 = vector.broadcast %cst_71 : f32 to vector<8x1xf32>
    %148 = arith.divf %146, %147 : vector<8x1xf32>
    %149 = vector.broadcast %141 : vector<8x1xf32> to vector<8x32xf32>
    %150 = arith.subf %137, %149 : vector<8x32xf32>
    %cst_72 = arith.constant 9.99999996E-13 : f32
    %151 = vector.broadcast %cst_72 : f32 to vector<8x1xf32>
    %152 = arith.addf %148, %151 : vector<8x1xf32>
    %153 = math.rsqrt %152 : vector<8x1xf32>
    %154 = vector.broadcast %153 : vector<8x1xf32> to vector<8x32xf32>
    %155 = arith.mulf %150, %154 : vector<8x32xf32>
    %156 = vector.shape_cast %13 : vector<32xf32> to vector<1x32xf32>
    %157 = vector.broadcast %156 : vector<1x32xf32> to vector<8x32xf32>
    %158 = arith.mulf %155, %157 : vector<8x32xf32>
    %159 = vector.shape_cast %15 : vector<32xf32> to vector<1x32xf32>
    %160 = vector.broadcast %159 : vector<1x32xf32> to vector<8x32xf32>
    %161 = arith.addf %158, %160 : vector<8x32xf32>
    %162 = arith.truncf %161 : vector<8x32xf32> to vector<8x32xbf16>
    %c0_73 = arith.constant 0 : index
    %c0_74 = arith.constant 0 : index
    %163 = vector.load %arg13[%c0_73, %c0_74] : memref<32x64xbf16, #tpu.memory_space<vmem>>, vector<32x64xbf16>
    %cst_75 = arith.constant dense<0.000000e+00> : vector<8x64xf32>
    %164 = tpu.matmul %162, %163, %cst_75 {dimension_numbers = #tpu.dot_dimension_numbers<[1], [0], [0], [1], [0, 0, 1, 1], [], []>} : vector<8x32xbf16>, vector<32x64xbf16>, vector<8x64xf32> -> vector<8x64xf32>
    %165 = vector.shape_cast %9 : vector<64xf32> to vector<1x64xf32>
    %166 = vector.broadcast %165 : vector<1x64xf32> to vector<8x64xf32>
    %167 = arith.addf %164, %166 : vector<8x64xf32>
    %cst_76 = arith.constant 0.000000e+00 : f32
    %168 = vector.broadcast %cst_76 : f32 to vector<8x64xf32>
    %169 = arith.maximumf %167, %168 : vector<8x64xf32>
    %170 = arith.truncf %169 : vector<8x64xf32> to vector<8x64xbf16>
    %c0_77 = arith.constant 0 : index
    %c0_78 = arith.constant 0 : index
    %171 = vector.load %arg15[%c0_77, %c0_78] : memref<64x32xbf16, #tpu.memory_space<vmem>>, vector<64x32xbf16>
    %cst_79 = arith.constant dense<0.000000e+00> : vector<8x32xf32>
    %172 = tpu.matmul %170, %171, %cst_79 {dimension_numbers = #tpu.dot_dimension_numbers<[1], [0], [0], [1], [0, 0, 1, 1], [], []>} : vector<8x64xbf16>, vector<64x32xbf16>, vector<8x32xf32> -> vector<8x32xf32>
    %173 = vector.shape_cast %11 : vector<32xf32> to vector<1x32xf32>
    %174 = vector.broadcast %173 : vector<1x32xf32> to vector<8x32xf32>
    %175 = arith.addf %172, %174 : vector<8x32xf32>
    %176 = arith.addf %161, %175 : vector<8x32xf32>
    %cst_80 = arith.constant dense<0.000000e+00> : vector<8xf32>
    %177 = vector.multi_reduction <add>, %176, %cst_80 [1] : vector<8x32xf32> to vector<8xf32>
    %178 = vector.shape_cast %177 : vector<8xf32> to vector<8x1xf32>
    %cst_81 = arith.constant 3.200000e+01 : f32
    %179 = vector.broadcast %cst_81 : f32 to vector<8x1xf32>
    %180 = arith.divf %178, %179 : vector<8x1xf32>
    %181 = vector.broadcast %180 : vector<8x1xf32> to vector<8x32xf32>
    %182 = arith.subf %176, %181 : vector<8x32xf32>
    %183 = arith.mulf %182, %182 : vector<8x32xf32>
    %cst_82 = arith.constant dense<0.000000e+00> : vector<8xf32>
    %184 = vector.multi_reduction <add>, %183, %cst_82 [1] : vector<8x32xf32> to vector<8xf32>
    %185 = vector.shape_cast %184 : vector<8xf32> to vector<8x1xf32>
    %cst_83 = arith.constant 3.200000e+01 : f32
    %186 = vector.broadcast %cst_83 : f32 to vector<8x1xf32>
    %187 = arith.divf %185, %186 : vector<8x1xf32>
    %188 = vector.broadcast %180 : vector<8x1xf32> to vector<8x32xf32>
    %189 = arith.subf %176, %188 : vector<8x32xf32>
    %cst_84 = arith.constant 9.99999996E-13 : f32
    %190 = vector.broadcast %cst_84 : f32 to vector<8x1xf32>
    %191 = arith.addf %187, %190 : vector<8x1xf32>
    %192 = math.rsqrt %191 : vector<8x1xf32>
    %193 = vector.broadcast %192 : vector<8x1xf32> to vector<8x32xf32>
    %194 = arith.mulf %189, %193 : vector<8x32xf32>
    %195 = vector.shape_cast %17 : vector<32xf32> to vector<1x32xf32>
    %196 = vector.broadcast %195 : vector<1x32xf32> to vector<8x32xf32>
    %197 = arith.mulf %194, %196 : vector<8x32xf32>
    %198 = vector.shape_cast %19 : vector<32xf32> to vector<1x32xf32>
    %199 = vector.broadcast %198 : vector<1x32xf32> to vector<8x32xf32>
    %200 = arith.addf %197, %199 : vector<8x32xf32>
    %201 = vector.shape_cast %200 : vector<8x32xf32> to vector<1x8x32xf32>
    %c0_85 = arith.constant 0 : index
    %c0_86 = arith.constant 0 : index
    %c0_87 = arith.constant 0 : index
    %202 = vector.load %arg19[%c0_85, %c0_86, %c0_87] : memref<1x8x32xf32, #tpu.memory_space<vmem>>, vector<1x8x32xf32>
    tpu.vector_store %arg19[%c0_85, %c0_86, %c0_87], %201 {strides = array<i32>} : memref<1x8x32xf32, #tpu.memory_space<vmem>>, vector<1x8x32xf32>,
    return
  }
  func.func @transform_0(%arg0: i32) -> (i32, i32, i32) {
    %c0_i32 = arith.constant 0 : i32
    %c0_i32_0 = arith.constant 0 : i32
    %c0_i32_1 = arith.constant 0 : i32
    return %arg0, %c0_i32, %c0_i32_0 : i32, i32, i32
  }
  func.func @transform_1(%arg0: i32) -> (i32, i32, i32) {
    %c0_i32 = arith.constant 0 : i32
    %c0_i32_0 = arith.constant 0 : i32
    %c0_i32_1 = arith.constant 0 : i32
    return %arg0, %c0_i32, %c0_i32_0 : i32, i32, i32
  }
  func.func @transform_2(%arg0: i32) -> (i32, i32) {
    %c0_i32 = arith.constant 0 : i32
    %c0_i32_0 = arith.constant 0 : i32
    %c0_i32_1 = arith.constant 0 : i32
    return %c0_i32, %c0_i32_0 : i32, i32
  }
  func.func @transform_3(%arg0: i32) -> (i32, i32) {
    %c0_i32 = arith.constant 0 : i32
    %c0_i32_0 = arith.constant 0 : i32
    %c0_i32_1 = arith.constant 0 : i32
    return %c0_i32, %c0_i32_0 : i32, i32
  }
  func.func @transform_4(%arg0: i32) -> (i32, i32) {
    %c0_i32 = arith.constant 0 : i32
    %c0_i32_0 = arith.constant 0 : i32
    %c0_i32_1 = arith.constant 0 : i32
    return %c0_i32, %c0_i32_0 : i32, i32
  }
  func.func @transform_5(%arg0: i32) -> (i32, i32) {
    %c0_i32 = arith.constant 0 : i32
    %c0_i32_0 = arith.constant 0 : i32
    %c0_i32_1 = arith.constant 0 : i32
    return %c0_i32, %c0_i32_0 : i32, i32
  }
  func.func @transform_6(%arg0: i32) -> (i32, i32) {
    %c0_i32 = arith.constant 0 : i32
    %c0_i32_0 = arith.constant 0 : i32
    %c0_i32_1 = arith.constant 0 : i32
    return %c0_i32, %c0_i32_0 : i32, i32
  }
  func.func @transform_7(%arg0: i32) -> (i32, i32) {
    %c0_i32 = arith.constant 0 : i32
    %c0_i32_0 = arith.constant 0 : i32
    %c0_i32_1 = arith.constant 0 : i32
    return %c0_i32, %c0_i32_0 : i32, i32
  }
  func.func @transform_8(%arg0: i32) -> (i32, i32) {
    %c0_i32 = arith.constant 0 : i32
    %c0_i32_0 = arith.constant 0 : i32
    %c0_i32_1 = arith.constant 0 : i32
    return %c0_i32, %c0_i32_0 : i32, i32
  }
  func.func @transform_9(%arg0: i32) -> (i32, i32) {
    %c0_i32 = arith.constant 0 : i32
    %c0_i32_0 = arith.constant 0 : i32
    %c0_i32_1 = arith.constant 0 : i32
    return %c0_i32, %c0_i32_0 : i32, i32
  }
  func.func @transform_10(%arg0: i32) -> (i32, i32) {
    %c0_i32 = arith.constant 0 : i32
    %c0_i32_0 = arith.constant 0 : i32
    %c0_i32_1 = arith.constant 0 : i32
    return %c0_i32, %c0_i32_0 : i32, i32
  }
  func.func @transform_11(%arg0: i32) -> (i32, i32) {
    %c0_i32 = arith.constant 0 : i32
    %c0_i32_0 = arith.constant 0 : i32
    %c0_i32_1 = arith.constant 0 : i32
    return %c0_i32, %c0_i32_0 : i32, i32
  }
  func.func @transform_12(%arg0: i32) -> (i32, i32) {
    %c0_i32 = arith.constant 0 : i32
    %c0_i32_0 = arith.constant 0 : i32
    %c0_i32_1 = arith.constant 0 : i32
    return %c0_i32, %c0_i32_0 : i32, i32
  }
  func.func @transform_13(%arg0: i32) -> (i32, i32) {
    %c0_i32 = arith.constant 0 : i32
    %c0_i32_0 = arith.constant 0 : i32
    %c0_i32_1 = arith.constant 0 : i32
    return %c0_i32, %c0_i32_0 : i32, i32
  }
  func.func @transform_14(%arg0: i32) -> (i32, i32) {
    %c0_i32 = arith.constant 0 : i32
    %c0_i32_0 = arith.constant 0 : i32
    %c0_i32_1 = arith.constant 0 : i32
    return %c0_i32, %c0_i32_0 : i32, i32
  }
  func.func @transform_15(%arg0: i32) -> (i32, i32) {
    %c0_i32 = arith.constant 0 : i32
    %c0_i32_0 = arith.constant 0 : i32
    %c0_i32_1 = arith.constant 0 : i32
    return %c0_i32, %c0_i32_0 : i32, i32
  }
  func.func @transform_16(%arg0: i32) -> (i32, i32) {
    %c0_i32 = arith.constant 0 : i32
    %c0_i32_0 = arith.constant 0 : i32
    %c0_i32_1 = arith.constant 0 : i32
    return %c0_i32, %c0_i32_0 : i32, i32
  }
  func.func @transform_17(%arg0: i32) -> (i32, i32) {
    %c0_i32 = arith.constant 0 : i32
    %c0_i32_0 = arith.constant 0 : i32
    %c0_i32_1 = arith.constant 0 : i32
    return %c0_i32, %c0_i32_0 : i32, i32
  }
  func.func @transform_18(%arg0: i32) -> (i32, i32, i32) {
    %c0_i32 = arith.constant 0 : i32
    %c0_i32_0 = arith.constant 0 : i32
    %c0_i32_1 = arith.constant 0 : i32
    return %arg0, %c0_i32, %c0_i32_0 : i32, i32, i32
  }
}

</mosaic_0001>

<llo_original>
// kernel: tpu_custom_call.1
$region0: #{tpu_custom_call.1}
  #allocation0 [shape = 'u32[]', space=smem, size = 0x4, offset = 0x4, fixed_abs, tag = 'smem constant byte address 0x4 - core index']
  #allocation1 [shape = 'u32[144,128]{1,0:T(1,128)}', space=vmem, size = 0x12000, scoped, tag = 'internal scratch']
  #allocation2 [shape = 'bf16[1,8,32]{2,1,0:T(8,128)(2,1)}', space=vmem, size = 0x800, scoped, tag = 'scratch operand']
  %s0 = inlined_call_operand.hbm [shape: bf16[2,8,32], index: 0, kind: input, shape index: {}]
  %s1 = inlined_call_operand.vmem [shape: f32[2,1,8], index: 1, kind: input, shape index: {}]
  %s2 = inlined_call_operand.vmem [shape: bf16[32,32], index: 2, kind: input, shape index: {}]
  %s3 = inlined_call_operand.hbm [shape: f32[1,32], index: 3, kind: input, shape index: {}]
  %s4 = inlined_call_operand.vmem [shape: bf16[32,32], index: 4, kind: input, shape index: {}]
  %s5 = inlined_call_operand.hbm [shape: f32[1,32], index: 5, kind: input, shape index: {}]
  %s6 = inlined_call_operand.vmem [shape: bf16[32,32], index: 6, kind: input, shape index: {}]
  %s7 = inlined_call_operand.hbm [shape: f32[1,32], index: 7, kind: input, shape index: {}]
  %s8 = inlined_call_operand.hbm [shape: bf16[32,32], index: 8, kind: input, shape index: {}]
  %s9 = inlined_call_operand.hbm [shape: f32[1,32], index: 9, kind: input, shape index: {}]
  %s10 = inlined_call_operand.vmem [shape: f32[1,32], index: 10, kind: input, shape index: {}]
  %s11 = inlined_call_operand.vmem [shape: f32[1,32], index: 11, kind: input, shape index: {}]
  %s12 = inlined_call_operand.vmem [shape: bf16[32,64], index: 12, kind: input, shape index: {}]
  %s13 = inlined_call_operand.vmem [shape: f32[1,64], index: 13, kind: input, shape index: {}]
  %s14 = inlined_call_operand.vmem [shape: bf16[64,32], index: 14, kind: input, shape index: {}]
  %s15 = inlined_call_operand.vmem [shape: f32[1,32], index: 15, kind: input, shape index: {}]
  %s16 = inlined_call_operand.vmem [shape: f32[1,32], index: 16, kind: input, shape index: {}]
  %s17 = inlined_call_operand.vmem [shape: f32[1,32], index: 17, kind: input, shape index: {}]
  %s18 = inlined_call_operand.hbm [shape: f32[2,8,32], index: 18, kind: output, shape index: {}]
  %s19 = sld [smem:[#allocation0]]
  $region129: #{tpu_custom_call.1} parent=0
    _
  %s21 = ssub.s32 1, %s19
  %s22 = scalar_select 0, %s21, %s19
  $region1: #{tpu_custom_call.1} parent=0
    #allocation3 [shape = 'u8[4096]{0}', space=vmem, size = 0x1000, scoped, tag = 'input window, operand 0']
    #allocation4 [shape = 's32[2]{0}', space=sflag, size = 0x8, scoped, tag = 'scoped memory for tpu_custom_call.1']
    #allocation5 [shape = 's32[2]{0}', space=sflag, size = 0x8, scoped, tag = 'scoped memory for tpu_custom_call.1']
    #allocation6 [shape = 'u8[512]{0}', space=vmem, size = 0x400, scoped, tag = 'input window, operand 3, single buffered']
    #allocation7 [shape = 's32[1]{0}', space=sflag, size = 0x4, scoped, tag = 'scoped memory for tpu_custom_call.1']
    #allocation8 [shape = 'u8[512]{0}', space=vmem, size = 0x400, scoped, tag = 'input window, operand 5, single buffered']
    #allocation9 [shape = 'u8[512]{0}', space=vmem, size = 0x400, scoped, tag = 'input window, operand 7, single buffered']
    #allocation10 [shape = 's32[1]{0}', space=sflag, size = 0x4, scoped, tag = 'scoped memory for tpu_custom_call.1']
    #allocation11 [shape = 'u8[8192]{0}', space=vmem, size = 0x2000, scoped, tag = 'input window, operand 8, single buffered']
    #allocation12 [shape = 'u8[512]{0}', space=vmem, size = 0x400, scoped, tag = 'input window, operand 9, single buffered']
    #allocation13 [shape = 's32[1]{0}', space=sflag, size = 0x4, scoped, tag = 'scoped memory for tpu_custom_call.1']
    #allocation14 [shape = 'u8[8192]{0}', space=vmem, size = 0x2000, scoped, tag = 'output window, operand 0']
    %23 = vsyncpa [#allocation4], 0
    %s24 = scalar_lea.sflag [#allocation4], 1
    %25 = vsyncpa %s24, 0
    %26 = vsyncpa [#allocation7], 0
    %27 = vsyncpa [#allocation10], 0
    %28 = vsyncpa [#allocation13], 0
    %29 = vsyncpa [#allocation5], 0
    %s30 = scalar_lea.sflag [#allocation5], 1
    %31 = vsyncpa %s30, 0
    loop: start=0, step=1, limit=4
    $region2: #{tpu_custom_call.1} parent=1 // loop_pre_header
      _
    $region3: #{tpu_custom_call.1} parent=1 // loop_header
      %s33 = sphi 0, %s37
      %p34 = scmp.ge.s32.totalorder %s33, 4
      %s43 = sphi 0, %s45
      %s46 = sphi 0, %s43
      %s47 = sphi 0, %s46
      %s63 = sphi 0, %s47
      %s69 = sphi 0, %s71
      %s72 = sphi 0, %s69
      %s73 = sphi 0, %s72
      %s89 = sphi 0, %s73
      %s93 = sphi 0, %s93
      %s95 = sphi 0, %s93
      %s96 = sphi 0, %s95
      %s110 = sphi 0, %s96
      %s114 = sphi 0, %s114
      %s116 = sphi 0, %s114
      %s117 = sphi 0, %s116
      %s131 = sphi 0, %s117
      %s135 = sphi 0, %s135
      %s137 = sphi 0, %s135
      %s138 = sphi 0, %s137
      %s152 = sphi 0, %s138
      %s156 = sphi 0, %s156
      %s158 = sphi 0, %s156
      %s159 = sphi 0, %s158
      %s173 = sphi 0, %s159
      %s177 = sphi 0, %s177
      %s179 = sphi 0, %s177
      %s180 = sphi 0, %s179
      %s194 = sphi 0, %s180
      %s198 = sphi 0, %s198
      %s200 = sphi 0, %s198
      %s201 = sphi 0, %s200
      %s215 = sphi 0, %s201
      %s219 = sphi 0, %s219
      %s221 = sphi 0, %s219
      %s222 = sphi 0, %s221
      %s236 = sphi 0, %s222
      %s240 = sphi 0, %s240
      %s242 = sphi 0, %s240
      %s243 = sphi 0, %s242
      %s257 = sphi 0, %s243
      %s261 = sphi 0, %s261
      %s263 = sphi 0, %s261
      %s264 = sphi 0, %s263
      %s278 = sphi 0, %s264
      %s282 = sphi 0, %s282
      %s284 = sphi 0, %s282
      %s285 = sphi 0, %s284
      %s299 = sphi 0, %s285
      %s303 = sphi 0, %s303
      %s305 = sphi 0, %s303
      %s306 = sphi 0, %s305
      %s320 = sphi 0, %s306
      %s324 = sphi 0, %s324
      %s326 = sphi 0, %s324
      %s327 = sphi 0, %s326
      %s341 = sphi 0, %s327
      %s345 = sphi 0, %s345
      %s347 = sphi 0, %s345
      %s348 = sphi 0, %s347
      %s362 = sphi 0, %s348
      %s366 = sphi 0, %s366
      %s368 = sphi 0, %s366
      %s369 = sphi 0, %s368
      %s383 = sphi 0, %s369
      %s387 = sphi 0, %s387
      %s389 = sphi 0, %s387
      %s390 = sphi 0, %s389
      %s404 = sphi 0, %s390
      %s408 = sphi 0, %s408
      %s410 = sphi 0, %s408
      %s411 = sphi 0, %s410
      %s425 = sphi 0, %s411
      %s431 = sphi 0, %s433
      %s434 = sphi 0, %s431
      %s435 = sphi 0, %s434
      %s451 = sphi 0, %s435
    $region4: #{tpu_custom_call.1} parent=1 // loop_header_branch
      %36 = sbr.rel (%p34) target = $region8
    $region5: #{tpu_custom_call.1} parent=1 // loop_body
      %s38 = ssub.s32 %s33, 1
      %s39 = ssub.s32 %s33, 2
      %s40 = sadd.s32 %s33, 1
      %s41 = ssub.s32 %s33, %s40
      %p42 = scmp.eq.s32.totalorder %s41, 0
      %s44 = sadd.s32 %s43, 1
      %s45 = scalar_select %p42, %s43, %s44
      %p48 = pneg %p42
      %p49 = scmp.eq.s32.totalorder %s33, 1
      %p50 = por %p48, %p49
      %p51 = scmp.ne.s32.totalorder %s43, %s46
      %p52 = scmp.eq.s32.totalorder %s33, 0
      %p53 = por %p51, %p52
      %p54 = scmp.ne.s32.totalorder %s43, %s46
      %p55 = scmp.eq.s32.totalorder %s38, 1
      %p56 = por %p54, %p55
      %p57 = scmp.ne.s32.totalorder %s46, %s47
      %p58 = scmp.eq.s32.totalorder %s38, 0
      %p59 = por %p57, %p58
      %p60 = scmp.ne.s32.totalorder %s46, %s47
      %p61 = scmp.eq.s32.totalorder %s39, 1
      %p62 = por %p60, %p61
      %p64 = scmp.ne.s32.totalorder %s47, %s63
      %p65 = scmp.eq.s32.totalorder %s39, 0
      %p66 = por %p64, %p65
      %s67 = ssub.s32 %s33, %s40
      %p68 = scmp.eq.s32.totalorder %s67, 0
      %s70 = sadd.s32 %s69, 1
      %s71 = scalar_select %p68, %s69, %s70
      %p74 = pneg %p68
      %p75 = scmp.eq.s32.totalorder %s33, 1
      %p76 = por %p74, %p75
      %p77 = scmp.ne.s32.totalorder %s69, %s72
      %p78 = scmp.eq.s32.totalorder %s33, 0
      %p79 = por %p77, %p78
      %p80 = scmp.ne.s32.totalorder %s69, %s72
      %p81 = scmp.eq.s32.totalorder %s38, 1
      %p82 = por %p80, %p81
      %p83 = scmp.ne.s32.totalorder %s72, %s73
      %p84 = scmp.eq.s32.totalorder %s38, 0
      %p85 = por %p83, %p84
      %p86 = scmp.ne.s32.totalorder %s72, %s73
      %p87 = scmp.eq.s32.totalorder %s39, 1
      %p88 = por %p86, %p87
      %p90 = scmp.ne.s32.totalorder %s73, %s89
      %p91 = scmp.eq.s32.totalorder %s39, 0
      %p92 = por %p90, %p91
      %s94 = sadd.s32 %s93, 1
      %p97 = scmp.eq.s32.totalorder %s33, 1
      %p98 = scmp.ne.s32.totalorder %s93, %s95
      %p99 = scmp.eq.s32.totalorder %s33, 0
      %p100 = por %p98, %p99
      %p101 = scmp.ne.s32.totalorder %s93, %s95
      %p102 = scmp.eq.s32.totalorder %s38, 1
      %p103 = por %p101, %p102
      %p104 = scmp.ne.s32.totalorder %s95, %s96
      %p105 = scmp.eq.s32.totalorder %s38, 0
      %p106 = por %p104, %p105
      %p107 = scmp.ne.s32.totalorder %s95, %s96
      %p108 = scmp.eq.s32.totalorder %s39, 1
      %p109 = por %p107, %p108
      %p111 = scmp.ne.s32.totalorder %s96, %s110
      %p112 = scmp.eq.s32.totalorder %s39, 0
      %p113 = por %p111, %p112
      %s115 = sadd.s32 %s114, 1
      %p118 = scmp.eq.s32.totalorder %s33, 1
      %p119 = scmp.ne.s32.totalorder %s114, %s116
      %p120 = scmp.eq.s32.totalorder %s33, 0
      %p121 = por %p119, %p120
      %p122 = scmp.ne.s32.totalorder %s114, %s116
      %p123 = scmp.eq.s32.totalorder %s38, 1
      %p124 = por %p122, %p123
      %p125 = scmp.ne.s32.totalorder %s116, %s117
      %p126 = scmp.eq.s32.totalorder %s38, 0
      %p127 = por %p125, %p126
      %p128 = scmp.ne.s32.totalorder %s116, %s117
      %p129 = scmp.eq.s32.totalorder %s39, 1
      %p130 = por %p128, %p129
      %p132 = scmp.ne.s32.totalorder %s117, %s131
      %p133 = scmp.eq.s32.totalorder %s39, 0
      %p134 = por %p132, %p133
      %s136 = sadd.s32 %s135, 1
      %p139 = scmp.eq.s32.totalorder %s33, 1
      %p140 = scmp.ne.s32.totalorder %s135, %s137
      %p141 = scmp.eq.s32.totalorder %s33, 0
      %p142 = por %p140, %p141
      %p143 = scmp.ne.s32.totalorder %s135, %s137
      %p144 = scmp.eq.s32.totalorder %s38, 1
      %p145 = por %p143, %p144
      %p146 = scmp.ne.s32.totalorder %s137, %s138
      %p147 = scmp.eq.s32.totalorder %s38, 0
      %p148 = por %p146, %p147
      %p149 = scmp.ne.s32.totalorder %s137, %s138
      %p150 = scmp.eq.s32.totalorder %s39, 1
      %p151 = por %p149, %p150
      %p153 = scmp.ne.s32.totalorder %s138, %s152
      %p154 = scmp.eq.s32.totalorder %s39, 0
      %p155 = por %p153, %p154
      %s157 = sadd.s32 %s156, 1
      %p160 = scmp.eq.s32.totalorder %s33, 1
      %p161 = scmp.ne.s32.totalorder %s156, %s158
      %p162 = scmp.eq.s32.totalorder %s33, 0
      %p163 = por %p161, %p162
      %p164 = scmp.ne.s32.totalorder %s156, %s158
      %p165 = scmp.eq.s32.totalorder %s38, 1
      %p166 = por %p164, %p165
      %p167 = scmp.ne.s32.totalorder %s158, %s159
      %p168 = scmp.eq.s32.totalorder %s38, 0
      %p169 = por %p167, %p168
      %p170 = scmp.ne.s32.totalorder %s158, %s159
      %p171 = scmp.eq.s32.totalorder %s39, 1
      %p172 = por %p170, %p171
      %p174 = scmp.ne.s32.totalorder %s159, %s173
      %p175 = scmp.eq.s32.totalorder %s39, 0
      %p176 = por %p174, %p175
      %s178 = sadd.s32 %s177, 1
      %p181 = scmp.eq.s32.totalorder %s33, 1
      %p182 = scmp.ne.s32.totalorder %s177, %s179
      %p183 = scmp.eq.s32.totalorder %s33, 0
      %p184 = por %p182, %p183
      %p185 = scmp.ne.s32.totalorder %s177, %s179
      %p186 = scmp.eq.s32.totalorder %s38, 1
      %p187 = por %p185, %p186
      %p188 = scmp.ne.s32.totalorder %s179, %s180
      %p189 = scmp.eq.s32.totalorder %s38, 0
      %p190 = por %p188, %p189
      %p191 = scmp.ne.s32.totalorder %s179, %s180
      %p192 = scmp.eq.s32.totalorder %s39, 1
      %p193 = por %p191, %p192
      %p195 = scmp.ne.s32.totalorder %s180, %s194
      %p196 = scmp.eq.s32.totalorder %s39, 0
      %p197 = por %p195, %p196
      %s199 = sadd.s32 %s198, 1
      %p202 = scmp.eq.s32.totalorder %s33, 1
      %p203 = scmp.ne.s32.totalorder %s198, %s200
      %p204 = scmp.eq.s32.totalorder %s33, 0
      %p205 = por %p203, %p204
      %p206 = scmp.ne.s32.totalorder %s198, %s200
      %p207 = scmp.eq.s32.totalorder %s38, 1
      %p208 = por %p206, %p207
      %p209 = scmp.ne.s32.totalorder %s200, %s201
      %p210 = scmp.eq.s32.totalorder %s38, 0
      %p211 = por %p209, %p210
      %p212 = scmp.ne.s32.totalorder %s200, %s201
      %p213 = scmp.eq.s32.totalorder %s39, 1
      %p214 = por %p212, %p213
      %p216 = scmp.ne.s32.totalorder %s201, %s215
      %p217 = scmp.eq.s32.totalorder %s39, 0
      %p218 = por %p216, %p217
      %s220 = sadd.s32 %s219, 1
      %p223 = scmp.eq.s32.totalorder %s33, 1
      %p224 = scmp.ne.s32.totalorder %s219, %s221
      %p225 = scmp.eq.s32.totalorder %s33, 0
      %p226 = por %p224, %p225
      %p227 = scmp.ne.s32.totalorder %s219, %s221
      %p228 = scmp.eq.s32.totalorder %s38, 1
      %p229 = por %p227, %p228
      %p230 = scmp.ne.s32.totalorder %s221, %s222
      %p231 = scmp.eq.s32.totalorder %s38, 0
      %p232 = por %p230, %p231
      %p233 = scmp.ne.s32.totalorder %s221, %s222
      %p234 = scmp.eq.s32.totalorder %s39, 1
      %p235 = por %p233, %p234
      %p237 = scmp.ne.s32.totalorder %s222, %s236
      %p238 = scmp.eq.s32.totalorder %s39, 0
      %p239 = por %p237, %p238
      %s241 = sadd.s32 %s240, 1
      %p244 = scmp.eq.s32.totalorder %s33, 1
      %p245 = scmp.ne.s32.totalorder %s240, %s242
      %p246 = scmp.eq.s32.totalorder %s33, 0
      %p247 = por %p245, %p246
      %p248 = scmp.ne.s32.totalorder %s240, %s242
      %p249 = scmp.eq.s32.totalorder %s38, 1
      %p250 = por %p248, %p249
      %p251 = scmp.ne.s32.totalorder %s242, %s243
      %p252 = scmp.eq.s32.totalorder %s38, 0
      %p253 = por %p251, %p252
      %p254 = scmp.ne.s32.totalorder %s242, %s243
      %p255 = scmp.eq.s32.totalorder %s39, 1
      %p256 = por %p254, %p255
      %p258 = scmp.ne.s32.totalorder %s243, %s257
      %p259 = scmp.eq.s32.totalorder %s39, 0
      %p260 = por %p258, %p259
      %s262 = sadd.s32 %s261, 1
      %p265 = scmp.eq.s32.totalorder %s33, 1
      %p266 = scmp.ne.s32.totalorder %s261, %s263
      %p267 = scmp.eq.s32.totalorder %s33, 0
      %p268 = por %p266, %p267
      %p269 = scmp.ne.s32.totalorder %s261, %s263
      %p270 = scmp.eq.s32.totalorder %s38, 1
      %p271 = por %p269, %p270
      %p272 = scmp.ne.s32.totalorder %s263, %s264
      %p273 = scmp.eq.s32.totalorder %s38, 0
      %p274 = por %p272, %p273
      %p275 = scmp.ne.s32.totalorder %s263, %s264
      %p276 = scmp.eq.s32.totalorder %s39, 1
      %p277 = por %p275, %p276
      %p279 = scmp.ne.s32.totalorder %s264, %s278
      %p280 = scmp.eq.s32.totalorder %s39, 0
      %p281 = por %p279, %p280
      %s283 = sadd.s32 %s282, 1
      %p286 = scmp.eq.s32.totalorder %s33, 1
      %p287 = scmp.ne.s32.totalorder %s282, %s284
      %p288 = scmp.eq.s32.totalorder %s33, 0
      %p289 = por %p287, %p288
      %p290 = scmp.ne.s32.totalorder %s282, %s284
      %p291 = scmp.eq.s32.totalorder %s38, 1
      %p292 = por %p290, %p291
      %p293 = scmp.ne.s32.totalorder %s284, %s285
      %p294 = scmp.eq.s32.totalorder %s38, 0
      %p295 = por %p293, %p294
      %p296 = scmp.ne.s32.totalorder %s284, %s285
      %p297 = scmp.eq.s32.totalorder %s39, 1
      %p298 = por %p296, %p297
      %p300 = scmp.ne.s32.totalorder %s285, %s299
      %p301 = scmp.eq.s32.totalorder %s39, 0
      %p302 = por %p300, %p301
      %s304 = sadd.s32 %s303, 1
      %p307 = scmp.eq.s32.totalorder %s33, 1
      %p308 = scmp.ne.s32.totalorder %s303, %s305
      %p309 = scmp.eq.s32.totalorder %s33, 0
      %p310 = por %p308, %p309
      %p311 = scmp.ne.s32.totalorder %s303, %s305
      %p312 = scmp.eq.s32.totalorder %s38, 1
      %p313 = por %p311, %p312
      %p314 = scmp.ne.s32.totalorder %s305, %s306
      %p315 = scmp.eq.s32.totalorder %s38, 0
      %p316 = por %p314, %p315
      %p317 = scmp.ne.s32.totalorder %s305, %s306
      %p318 = scmp.eq.s32.totalorder %s39, 1
      %p319 = por %p317, %p318
      %p321 = scmp.ne.s32.totalorder %s306, %s320
      %p322 = scmp.eq.s32.totalorder %s39, 0
      %p323 = por %p321, %p322
      %s325 = sadd.s32 %s324, 1
      %p328 = scmp.eq.s32.totalorder %s33, 1
      %p329 = scmp.ne.s32.totalorder %s324, %s326
      %p330 = scmp.eq.s32.totalorder %s33, 0
      %p331 = por %p329, %p330
      %p332 = scmp.ne.s32.totalorder %s324, %s326
      %p333 = scmp.eq.s32.totalorder %s38, 1
      %p334 = por %p332, %p333
      %p335 = scmp.ne.s32.totalorder %s326, %s327
      %p336 = scmp.eq.s32.totalorder %s38, 0
      %p337 = por %p335, %p336
      %p338 = scmp.ne.s32.totalorder %s326, %s327
      %p339 = scmp.eq.s32.totalorder %s39, 1
      %p340 = por %p338, %p339
      %p342 = scmp.ne.s32.totalorder %s327, %s341
      %p343 = scmp.eq.s32.totalorder %s39, 0
      %p344 = por %p342, %p343
      %s346 = sadd.s32 %s345, 1
      %p349 = scmp.eq.s32.totalorder %s33, 1
      %p350 = scmp.ne.s32.totalorder %s345, %s347
      %p351 = scmp.eq.s32.totalorder %s33, 0
      %p352 = por %p350, %p351
      %p353 = scmp.ne.s32.totalorder %s345, %s347
      %p354 = scmp.eq.s32.totalorder %s38, 1
      %p355 = por %p353, %p354
      %p356 = scmp.ne.s32.totalorder %s347, %s348
      %p357 = scmp.eq.s32.totalorder %s38, 0
      %p358 = por %p356, %p357
      %p359 = scmp.ne.s32.totalorder %s347, %s348
      %p360 = scmp.eq.s32.totalorder %s39, 1
      %p361 = por %p359, %p360
      %p363 = scmp.ne.s32.totalorder %s348, %s362
      %p364 = scmp.eq.s32.totalorder %s39, 0
      %p365 = por %p363, %p364
      %s367 = sadd.s32 %s366, 1
      %p370 = scmp.eq.s32.totalorder %s33, 1
      %p371 = scmp.ne.s32.totalorder %s366, %s368
      %p372 = scmp.eq.s32.totalorder %s33, 0
      %p373 = por %p371, %p372
      %p374 = scmp.ne.s32.totalorder %s366, %s368
      %p375 = scmp.eq.s32.totalorder %s38, 1
      %p376 = por %p374, %p375
      %p377 = scmp.ne.s32.totalorder %s368, %s369
      %p378 = scmp.eq.s32.totalorder %s38, 0
      %p379 = por %p377, %p378
      %p380 = scmp.ne.s32.totalorder %s368, %s369
      %p381 = scmp.eq.s32.totalorder %s39, 1
      %p382 = por %p380, %p381
      %p384 = scmp.ne.s32.totalorder %s369, %s383
      %p385 = scmp.eq.s32.totalorder %s39, 0
      %p386 = por %p384, %p385
      %s388 = sadd.s32 %s387, 1
      %p391 = scmp.eq.s32.totalorder %s33, 1
      %p392 = scmp.ne.s32.totalorder %s387, %s389
      %p393 = scmp.eq.s32.totalorder %s33, 0
      %p394 = por %p392, %p393
      %p395 = scmp.ne.s32.totalorder %s387, %s389
      %p396 = scmp.eq.s32.totalorder %s38, 1
      %p397 = por %p395, %p396
      %p398 = scmp.ne.s32.totalorder %s389, %s390
      %p399 = scmp.eq.s32.totalorder %s38, 0
      %p400 = por %p398, %p399
      %p401 = scmp.ne.s32.totalorder %s389, %s390
      %p402 = scmp.eq.s32.totalorder %s39, 1
      %p403 = por %p401, %p402
      %p405 = scmp.ne.s32.totalorder %s390, %s404
      %p406 = scmp.eq.s32.totalorder %s39, 0
      %p407 = por %p405, %p406
      %s409 = sadd.s32 %s408, 1
      %p412 = scmp.eq.s32.totalorder %s33, 1
      %p413 = scmp.ne.s32.totalorder %s408, %s410
      %p414 = scmp.eq.s32.totalorder %s33, 0
      %p415 = por %p413, %p414
      %p416 = scmp.ne.s32.totalorder %s408, %s410
      %p417 = scmp.eq.s32.totalorder %s38, 1
      %p418 = por %p416, %p417
      %p419 = scmp.ne.s32.totalorder %s410, %s411
      %p420 = scmp.eq.s32.totalorder %s38, 0
      %p421 = por %p419, %p420
      %p422 = scmp.ne.s32.totalorder %s410, %s411
      %p423 = scmp.eq.s32.totalorder %s39, 1
      %p424 = por %p422, %p423
      %p426 = scmp.ne.s32.totalorder %s411, %s425
      %p427 = scmp.eq.s32.totalorder %s39, 0
      %p428 = por %p426, %p427
      %s429 = ssub.s32 %s33, %s40
      %p430 = scmp.eq.s32.totalorder %s429, 0
      %s432 = sadd.s32 %s431, 1
      %s433 = scalar_select %p430, %s431, %s432
      %p436 = pneg %p430
      %p437 = scmp.eq.s32.totalorder %s33, 1
      %p438 = por %p436, %p437
      %p439 = scmp.ne.s32.totalorder %s431, %s434
      %p440 = scmp.eq.s32.totalorder %s33, 0
      %p441 = por %p439, %p440
      %p442 = scmp.ne.s32.totalorder %s431, %s434
      %p443 = scmp.eq.s32.totalorder %s38, 1
      %p444 = por %p442, %p443
      %p445 = scmp.ne.s32.totalorder %s434, %s435
      %p446 = scmp.eq.s32.totalorder %s38, 0
      %p447 = por %p445, %p446
      %p448 = scmp.ne.s32.totalorder %s434, %s435
      %p449 = scmp.eq.s32.totalorder %s39, 1
      %p450 = por %p448, %p449
      %p452 = scmp.ne.s32.totalorder %s435, %s451
      %p453 = scmp.eq.s32.totalorder %s39, 0
      %p454 = por %p452, %p453
      %p455 = scmp.le.s32.totalorder 1, %s33
      %p456 = scmp.lt.s32.totalorder %s33, 3
      %p457 = pnand %p455, %p456
      %p458 = pneg %p457
      // Predicated region
      $region9: #{tpu_custom_call.1} parent=5 // pred_check
        _
      $region10: #{tpu_custom_call.1} parent=5 // pred_check_branch
        %460 = sbr.rel (%p457) target = $region12
      $region11: #{tpu_custom_call.1} parent=5 // pred_region
        %s461 = ssub.s32 %s33, 1
        // Predicated region
        $region13: #{tpu_custom_call.1} parent=11 // pred_check
          %p462 = pneg %p106
        $region14: #{tpu_custom_call.1} parent=11 // pred_check_branch
          %464 = sbr.rel (%p462) target = $region16
        $region15: #{tpu_custom_call.1} parent=11 // pred_region
          _
        $region16: #{tpu_custom_call.1} parent=11 // pred_fallthru
          _
        // Predicated region
        $region17: #{tpu_custom_call.1} parent=11 // pred_check
          %p465 = pneg %p127
        $region18: #{tpu_custom_call.1} parent=11 // pred_check_branch
          %467 = sbr.rel (%p465) target = $region20
        $region19: #{tpu_custom_call.1} parent=11 // pred_region
          %s469 = ssub.s32 16, 16
          %470 = vsyncadd [#allocation7], %s469
          %s472 = sshll.u32 [#allocation6], 4
          %s473 = int_to_ptr.vmem [resolvable:$true] %s472
          %475 = dma.hbm_to_vmem [thread:$0]  %s3, 16, %s473, [#allocation7]
        $region20: #{tpu_custom_call.1} parent=11 // pred_fallthru
          _
        // Predicated region
        $region21: #{tpu_custom_call.1} parent=11 // pred_check
          %p476 = pneg %p148
        $region22: #{tpu_custom_call.1} parent=11 // pred_check_branch
          %478 = sbr.rel (%p476) target = $region24
        $region23: #{tpu_custom_call.1} parent=11 // pred_region
          _
        $region24: #{tpu_custom_call.1} parent=11 // pred_fallthru
          _
        // Predicated region
        $region25: #{tpu_custom_call.1} parent=11 // pred_check
          %p479 = pneg %p169
        $region26: #{tpu_custom_call.1} parent=11 // pred_check_branch
          %481 = sbr.rel (%p479) target = $region28
        $region27: #{tpu_custom_call.1} parent=11 // pred_region
          %s483 = ssub.s32 16, 16
          %484 = vsyncadd [#allocation7], %s483
          %s486 = sshll.u32 [#allocation8], 4
          %s487 = int_to_ptr.vmem [resolvable:$true] %s486
          %489 = dma.hbm_to_vmem [thread:$0]  %s5, 16, %s487, [#allocation7]
        $region28: #{tpu_custom_call.1} parent=11 // pred_fallthru
          _
        // Predicated region
        $region29: #{tpu_custom_call.1} parent=11 // pred_check
          %p490 = pneg %p190
        $region30: #{tpu_custom_call.1} parent=11 // pred_check_branch
          %492 = sbr.rel (%p490) target = $region32
        $region31: #{tpu_custom_call.1} parent=11 // pred_region
          _
        $region32: #{tpu_custom_call.1} parent=11 // pred_fallthru
          _
        // Predicated region
        $region33: #{tpu_custom_call.1} parent=11 // pred_check
          %p493 = pneg %p211
        $region34: #{tpu_custom_call.1} parent=11 // pred_check_branch
          %495 = sbr.rel (%p493) target = $region36
        $region35: #{tpu_custom_call.1} parent=11 // pred_region
          %s497 = ssub.s32 16, 16
          %498 = vsyncadd [#allocation10], %s497
          %s500 = sshll.u32 [#allocation9], 4
          %s501 = int_to_ptr.vmem [resolvable:$true] %s500
          %503 = dma.hbm_to_vmem [thread:$0]  %s7, 16, %s501, [#allocation10]
        $region36: #{tpu_custom_call.1} parent=11 // pred_fallthru
          _
        // Predicated region
        $region37: #{tpu_custom_call.1} parent=11 // pred_check
          %p504 = pneg %p232
        $region38: #{tpu_custom_call.1} parent=11 // pred_check_branch
          %506 = sbr.rel (%p504) target = $region40
        $region39: #{tpu_custom_call.1} parent=11 // pred_region
          %s508 = ssub.s32 256, 256
          %509 = vsyncadd [#allocation10], %s508
          %s510 = sshll.u32 [#allocation11], 4
          %s511 = int_to_ptr.vmem [resolvable:$true] %s510
          %516 = dma.hbm_to_vmem [thread:$0]  %s8, 256, %s511, [#allocation10], 64, 64, 4
        $region40: #{tpu_custom_call.1} parent=11 // pred_fallthru
          _
        // Predicated region
        $region41: #{tpu_custom_call.1} parent=11 // pred_check
          %p517 = pneg %p253
        $region42: #{tpu_custom_call.1} parent=11 // pred_check_branch
          %519 = sbr.rel (%p517) target = $region44
        $region43: #{tpu_custom_call.1} parent=11 // pred_region
          %s521 = ssub.s32 16, 16
          %522 = vsyncadd [#allocation13], %s521
          %s524 = sshll.u32 [#allocation12], 4
          %s525 = int_to_ptr.vmem [resolvable:$true] %s524
          %527 = dma.hbm_to_vmem [thread:$0]  %s9, 16, %s525, [#allocation13]
        $region44: #{tpu_custom_call.1} parent=11 // pred_fallthru
          _
        // Predicated region
        $region45: #{tpu_custom_call.1} parent=11 // pred_check
          %p528 = pneg %p274
        $region46: #{tpu_custom_call.1} parent=11 // pred_check_branch
          %530 = sbr.rel (%p528) target = $region48
        $region47: #{tpu_custom_call.1} parent=11 // pred_region
          _
        $region48: #{tpu_custom_call.1} parent=11 // pred_fallthru
          _
        // Predicated region
        $region49: #{tpu_custom_call.1} parent=11 // pred_check
          %p531 = pneg %p295
        $region50: #{tpu_custom_call.1} parent=11 // pred_check_branch
          %533 = sbr.rel (%p531) target = $region52
        $region51: #{tpu_custom_call.1} parent=11 // pred_region
          _
        $region52: #{tpu_custom_call.1} parent=11 // pred_fallthru
          _
        // Predicated region
        $region53: #{tpu_custom_call.1} parent=11 // pred_check
          %p534 = pneg %p316
        $region54: #{tpu_custom_call.1} parent=11 // pred_check_branch
          %536 = sbr.rel (%p534) target = $region56
        $region55: #{tpu_custom_call.1} parent=11 // pred_region
          _
        $region56: #{tpu_custom_call.1} parent=11 // pred_fallthru
          _
        // Predicated region
        $region57: #{tpu_custom_call.1} parent=11 // pred_check
          %p537 = pneg %p337
        $region58: #{tpu_custom_call.1} parent=11 // pred_check_branch
          %539 = sbr.rel (%p537) target = $region60
        $region59: #{tpu_custom_call.1} parent=11 // pred_region
          _
        $region60: #{tpu_custom_call.1} parent=11 // pred_fallthru
          _
        // Predicated region
        $region61: #{tpu_custom_call.1} parent=11 // pred_check
          %p540 = pneg %p358
        $region62: #{tpu_custom_call.1} parent=11 // pred_check_branch
          %542 = sbr.rel (%p540) target = $region64
        $region63: #{tpu_custom_call.1} parent=11 // pred_region
          _
        $region64: #{tpu_custom_call.1} parent=11 // pred_fallthru
          _
        // Predicated region
        $region65: #{tpu_custom_call.1} parent=11 // pred_check
          %p543 = pneg %p379
        $region66: #{tpu_custom_call.1} parent=11 // pred_check_branch
          %545 = sbr.rel (%p543) target = $region68
        $region67: #{tpu_custom_call.1} parent=11 // pred_region
          _
        $region68: #{tpu_custom_call.1} parent=11 // pred_fallthru
          _
        // Predicated region
        $region69: #{tpu_custom_call.1} parent=11 // pred_check
          %p546 = pneg %p400
        $region70: #{tpu_custom_call.1} parent=11 // pred_check_branch
          %548 = sbr.rel (%p546) target = $region72
        $region71: #{tpu_custom_call.1} parent=11 // pred_region
          _
        $region72: #{tpu_custom_call.1} parent=11 // pred_fallthru
          _
        // Predicated region
        $region73: #{tpu_custom_call.1} parent=11 // pred_check
          %p549 = pneg %p421
        $region74: #{tpu_custom_call.1} parent=11 // pred_check_branch
          %551 = sbr.rel (%p549) target = $region76
        $region75: #{tpu_custom_call.1} parent=11 // pred_region
          _
        $region76: #{tpu_custom_call.1} parent=11 // pred_fallthru
          _
      $region12: #{tpu_custom_call.1} parent=5 // pred_fallthru
        _
      %p552 = scmp.lt.s32.totalorder %s33, 2
      // Predicated region
      $region77: #{tpu_custom_call.1} parent=5 // pred_check
        %p553 = pneg %p552
      $region78: #{tpu_custom_call.1} parent=5 // pred_check_branch
        %555 = sbr.rel (%p553) target = $region80
      $region79: #{tpu_custom_call.1} parent=5 // pred_region
        // Predicated region
        $region81: #{tpu_custom_call.1} parent=79 // pred_check
          %p556 = pneg %p53
        $region82: #{tpu_custom_call.1} parent=79 // pred_check_branch
          %558 = sbr.rel (%p556) target = $region84
        $region83: #{tpu_custom_call.1} parent=79 // pred_region
          %s559 = sand.u32 %s43, 1
          %s560 = scalar_lea.sflag [#allocation4], %s559
          %s561 = sand.u32 %s43, 1
          %s562 = smul.addr %s561, 4
          %s563 = scalar_lea.vmem [#allocation3], %s562
          %s565 = ssub.s32 64, 64
          %566 = vsyncadd %s560, %s565
          %s567 = smul.addr %s33, 64
          %s568 = scalar_lea.hbm %s0, %s567
          %s570 = sshll.u32 %s563, 4
          %s571 = int_to_ptr.vmem [resolvable:$true] %s570
          %573 = dma.hbm_to_vmem [thread:$0]  %s568, 64, %s571, %s560
        $region84: #{tpu_custom_call.1} parent=79 // pred_fallthru
          _
        // Predicated region
        $region85: #{tpu_custom_call.1} parent=79 // pred_check
          %p574 = pneg %p79
        $region86: #{tpu_custom_call.1} parent=79 // pred_check_branch
          %576 = sbr.rel (%p574) target = $region88
        $region87: #{tpu_custom_call.1} parent=79 // pred_region
          %p577 = scmp.lt.s32.totalorder %s33, 1
          %s578 = scalar_select %p577, %s33, 1
          %s579 = scalar_lea.vmem %s1, %s578
        $region88: #{tpu_custom_call.1} parent=79 // pred_fallthru
          _
      $region80: #{tpu_custom_call.1} parent=5 // pred_fallthru
        _
      %p580 = scmp.le.s32.totalorder 1, %s33
      %p581 = scmp.lt.s32.totalorder %s33, 3
      %p582 = pnand %p580, %p581
      %p583 = pneg %p582
      // Predicated region
      $region89: #{tpu_custom_call.1} parent=5 // pred_check
        _
      $region90: #{tpu_custom_call.1} parent=5 // pred_check_branch
        %585 = sbr.rel (%p582) target = $region92
      $region91: #{tpu_custom_call.1} parent=5 // pred_region
        %s586 = ssub.s32 %s33, 1
        %s587 = sand.u32 %s46, 1
        %s588 = scalar_lea.sflag [#allocation4], %s587
        %s589 = sand.u32 %s46, 1
        %s590 = smul.addr %s589, 4
        %s591 = scalar_lea.vmem [#allocation3], %s590
        // Predicated region
        $region93: #{tpu_custom_call.1} parent=91 // pred_check
          %p592 = pneg %p59
        $region94: #{tpu_custom_call.1} parent=91 // pred_check_branch
          %594 = sbr.rel (%p592) target = $region96
        $region95: #{tpu_custom_call.1} parent=91 // pred_region
          %595 = dma.done %s588, 64
        $region96: #{tpu_custom_call.1} parent=91 // pred_fallthru
          _
        // Predicated region
        $region97: #{tpu_custom_call.1} parent=91 // pred_check
          %p596 = pneg %p127
        $region98: #{tpu_custom_call.1} parent=91 // pred_check_branch
          %598 = sbr.rel (%p596) target = $region100
        $region99: #{tpu_custom_call.1} parent=91 // pred_region
          %599 = dma.done [#allocation7], 16
        $region100: #{tpu_custom_call.1} parent=91 // pred_fallthru
          _
        // Predicated region
        $region101: #{tpu_custom_call.1} parent=91 // pred_check
          %p600 = pneg %p169
        $region102: #{tpu_custom_call.1} parent=91 // pred_check_branch
          %602 = sbr.rel (%p600) target = $region104
        $region103: #{tpu_custom_call.1} parent=91 // pred_region
          %603 = dma.done [#allocation7], 16
        $region104: #{tpu_custom_call.1} parent=91 // pred_fallthru
          _
        // Predicated region
        $region105: #{tpu_custom_call.1} parent=91 // pred_check
          %p604 = pneg %p211
        $region106: #{tpu_custom_call.1} parent=91 // pred_check_branch
          %606 = sbr.rel (%p604) target = $region108
        $region107: #{tpu_custom_call.1} parent=91 // pred_region
          %607 = dma.done [#allocation10], 16
        $region108: #{tpu_custom_call.1} parent=91 // pred_fallthru
          _
        // Predicated region
        $region109: #{tpu_custom_call.1} parent=91 // pred_check
          %p608 = pneg %p232
        $region110: #{tpu_custom_call.1} parent=91 // pred_check_branch
          %610 = sbr.rel (%p608) target = $region112
        $region111: #{tpu_custom_call.1} parent=91 // pred_region
          %611 = dma.done [#allocation10], 256
        $region112: #{tpu_custom_call.1} parent=91 // pred_fallthru
          _
        // Predicated region
        $region113: #{tpu_custom_call.1} parent=91 // pred_check
          %p612 = pneg %p253
        $region114: #{tpu_custom_call.1} parent=91 // pred_check_branch
          %614 = sbr.rel (%p612) target = $region116
        $region115: #{tpu_custom_call.1} parent=91 // pred_region
          %615 = dma.done [#allocation13], 16
        $region116: #{tpu_custom_call.1} parent=91 // pred_fallthru
          _
        %s616 = sand.u32 %s46, 1
        %s617 = scalar_lea.sflag [#allocation4], %s616
        %s618 = sand.u32 %s46, 1
        %s619 = smul.addr %s618, 4
        %s620 = scalar_lea.vmem [#allocation3], %s619
        %p621 = pneg %p59
        %p622 = pneg %p56
        %p623 = scmp.lt.s32.totalorder %s38, 1
        %s624 = scalar_select %p623, %s38, 1
        %s625 = scalar_lea.vmem %s1, %s624
        %p626 = pneg %p85
        %p627 = pneg %p82
        %p628 = pneg %p106
        %p629 = pneg %p103
        %p630 = pneg %p127
        %p631 = pneg %p124
        %p632 = pneg %p148
        %p633 = pneg %p145
        %p634 = pneg %p169
        %p635 = pneg %p166
        %p636 = pneg %p190
        %p637 = pneg %p187
        %p638 = pneg %p211
        %p639 = pneg %p208
        %p640 = pneg %p232
        %p641 = pneg %p229
        %p642 = pneg %p253
        %p643 = pneg %p250
        %p644 = pneg %p274
        %p645 = pneg %p271
        %p646 = pneg %p295
        %p647 = pneg %p292
        %p648 = pneg %p316
        %p649 = pneg %p313
        %p650 = pneg %p337
        %p651 = pneg %p334
        %p652 = pneg %p358
        %p653 = pneg %p355
        %p654 = pneg %p379
        %p655 = pneg %p376
        %p656 = pneg %p400
        %p657 = pneg %p397
        %p658 = pneg %p421
        %p659 = pneg %p418
        %p660 = pneg %p447
        %p661 = pneg %p444
        %s662 = sand.u32 %s434, 1
        %s663 = scalar_lea.sflag [#allocation5], %s662
        %s664 = sand.u32 %s434, 1
        %s665 = smul.addr %s664, 8
        %s666 = scalar_lea.vmem [#allocation14], %s665
        %p667 = scmp.lt.s32.totalorder %s38, 1
        %s668 = scalar_select %p667, %s38, 1
        %s669 = scalar_lea.vmem %s1, %s668
        %v671 = vld [vmem:[#allocation6] sm:$0x1]
        %v672 = vld [vmem:[#allocation8] sm:$0x1]
        %v673 = vld [vmem:[#allocation9] sm:$0x1]
        %v674 = vld [vmem:[#allocation12] sm:$0x1]
        %v675 = vld [vmem:[%s13] sm:$0x1]
        %v676 = vld [vmem:[%s15] sm:$0x1]
        %v677 = vld [vmem:[%s10] sm:$0x1]
        %v678 = vld [vmem:[%s11] sm:$0x1]
        %v679 = vld [vmem:[%s16] sm:$0x1]
        %v680 = vld [vmem:[%s17] sm:$0x1]
        %v681 = vld [vmem:[%s591] sm:$0xf]
        %v682 = vunpack.c.l.bf16 %v681
        %v683 = vld [vmem:[%s669] sm:$0x1]
        %vm684 = vcmp.ne.f32.partialorder %v683, 0.0
        %v685 = vsel %vm684, 0.0, -1e+09
        %v687 = vlaneseq
        %v688 = vshrl.u32 %v687, 7
        %v689 = vsub.s32 0, %v688
        %v690 = vrot.slane %v685, %v689
        %v692 = vld [vmem:[%s2] sm:$0xf]
        %v693 = vld [vmem:[%s2 + $0x4] sm:$0xf]
        %v694 = vld [vmem:[%s2 + $0x8] sm:$0xf]
        %v695 = vld [vmem:[%s2 + $0xc] sm:$0xf]
        %v697 = vlaneseq
        %v698 = vshrl.u32 %v697, 7
        %v699 = vsub.s32 0, %v698
        %v700 = vrot.slane %v671, %v699
        %v706 = vunpack.c.l.b16 %v692
        %v707 = vunpack.c.l.b16 %v693
        %v708 = vunpack.c.l.b16 %v694
        %v709 = vunpack.c.l.b16 %v695
        %v710 = vpack.c.b16 %v707, %v706
        %v711 = vpack.c.b16 %v709, %v708
        %vm714 = vcmask 261120
        %v716 = vsel %vm714, %v681, 0
        %718 = vmatprep.subr.bf16.mxu0 0
        %719 = vmatpush1.bf16.msra.mxu0 %v710
        %720 = vmatprep.subr.bf16.mxu0 0
        %721 = vmatpush1.bf16.msra.mxu0 %v711
        %722 = vmatprep.subr.bf16.mxu0 0
        %723 = vmatpush1.bf16.msra.mxu0 0
        %724 = vmatprep.subr.bf16.mxu0 0
        %725 = vmatpush1.bf16.msra.mxu0 0
        %726 = vmatprep.subr.bf16.mxu0 0
        %727 = vmatpush1.bf16.msra.mxu0 0
        %728 = vmatprep.subr.bf16.mxu0 0
        %729 = vmatpush1.bf16.msra.mxu0 0
        %730 = vmatprep.subr.bf16.mxu0 0
        %731 = vmatpush1.bf16.msra.mxu0 0
        %732 = vmatprep.subr.bf16.mxu0 0
        %733 = vmatpush1.bf16.msra.mxu0 0
        %734 = vmatprep.subr.bf16.mxu0 0
        %735 = vmatpush1.bf16.msra.mxu0 0
        %736 = vmatprep.subr.bf16.mxu0 0
        %737 = vmatpush1.bf16.msra.mxu0 0
        %738 = vmatprep.subr.bf16.mxu0 0
        %739 = vmatpush1.bf16.msra.mxu0 0
        %740 = vmatprep.subr.bf16.mxu0 0
        %741 = vmatpush1.bf16.msra.mxu0 0
        %742 = vmatprep.subr.bf16.mxu0 0
        %743 = vmatpush1.bf16.msra.mxu0 0
        %744 = vmatprep.subr.bf16.mxu0 0
        %745 = vmatpush1.bf16.msra.mxu0 0
        %746 = vmatprep.subr.bf16.mxu0 0
        %747 = vmatpush1.bf16.msra.mxu0 0
        %748 = vmatprep.subr.bf16.mxu0 0
        %749 = vmatpush1.bf16.msra.mxu0 0
        %750 = vmatprep.mubr.bf16.mxu0 0
        %751 = vmatmul.mubr.bf16.gmra.mrb[0].mxu0 %v716
        %v752 = vpop.f32.mrb[0].mxu0
        %v753 = vadd.f32 %v700, %v752
        %v754 = vpop.f32.mrb[0].mxu0
        %v755 = vpop.f32.mrb[0].mxu0
        %v756 = vpop.f32.mrb[0].mxu0
        %757 = vdwg.mxu0
        %v758 = vmul.f32 %v753, 0.35355338
        %v759 = vpack.c.bf16 %v758, %v758
        %v760 = vld [vmem:[%s4] sm:$0xf]
        %v761 = vld [vmem:[%s4 + $0x4] sm:$0xf]
        %v762 = vld [vmem:[%s4 + $0x8] sm:$0xf]
        %v763 = vld [vmem:[%s4 + $0xc] sm:$0xf]
        %v765 = vlaneseq
        %v766 = vshrl.u32 %v765, 7
        %v767 = vsub.s32 0, %v766
        %v768 = vrot.slane %v672, %v767
        %v774 = vunpack.c.l.b16 %v760
        %v775 = vunpack.c.l.b16 %v761
        %v776 = vunpack.c.l.b16 %v762
        %v777 = vunpack.c.l.b16 %v763
        %v778 = vpack.c.b16 %v775, %v774
        %v779 = vpack.c.b16 %v777, %v776
        %782 = vmatprep.subr.bf16.mxu0 0
        %783 = vmatpush1.bf16.msra.mxu0 %v778
        %784 = vmatprep.subr.bf16.mxu0 0
        %785 = vmatpush1.bf16.msra.mxu0 %v779
        %786 = vmatprep.subr.bf16.mxu0 0
        %787 = vmatpush1.bf16.msra.mxu0 0
        %788 = vmatprep.subr.bf16.mxu0 0
        %789 = vmatpush1.bf16.msra.mxu0 0
        %790 = vmatprep.subr.bf16.mxu0 0
        %791 = vmatpush1.bf16.msra.mxu0 0
        %792 = vmatprep.subr.bf16.mxu0 0
        %793 = vmatpush1.bf16.msra.mxu0 0
        %794 = vmatprep.subr.bf16.mxu0 0
        %795 = vmatpush1.bf16.msra.mxu0 0
        %796 = vmatprep.subr.bf16.mxu0 0
        %797 = vmatpush1.bf16.msra.mxu0 0
        %798 = vmatprep.subr.bf16.mxu0 0
        %799 = vmatpush1.bf16.msra.mxu0 0
        %800 = vmatprep.subr.bf16.mxu0 0
        %801 = vmatpush1.bf16.msra.mxu0 0
        %802 = vmatprep.subr.bf16.mxu0 0
        %803 = vmatpush1.bf16.msra.mxu0 0
        %804 = vmatprep.subr.bf16.mxu0 0
        %805 = vmatpush1.bf16.msra.mxu0 0
        %806 = vmatprep.subr.bf16.mxu0 0
        %807 = vmatpush1.bf16.msra.mxu0 0
        %808 = vmatprep.subr.bf16.mxu0 0
        %809 = vmatpush1.bf16.msra.mxu0 0
        %810 = vmatprep.subr.bf16.mxu0 0
        %811 = vmatpush1.bf16.msra.mxu0 0
        %812 = vmatprep.subr.bf16.mxu0 0
        %813 = vmatpush1.bf16.msra.mxu0 0
        %814 = vmatprep.mubr.bf16.mxu0 0
        %815 = vmatmul.mubr.bf16.gmra.mrb[0].mxu0 %v716
        %v816 = vpop.f32.mrb[0].mxu0
        %v817 = vadd.f32 %v768, %v816
        %v818 = vpop.f32.mrb[0].mxu0
        %v819 = vpop.f32.mrb[0].mxu0
        %v820 = vpop.f32.mrb[0].mxu0
        %821 = vdwg.mxu0
        %v822 = vpack.c.bf16 %v817, %v817
        %v823 = vld [vmem:[%s6] sm:$0xf]
        %v824 = vld [vmem:[%s6 + $0x4] sm:$0xf]
        %v825 = vld [vmem:[%s6 + $0x8] sm:$0xf]
        %v826 = vld [vmem:[%s6 + $0xc] sm:$0xf]
        %v828 = vlaneseq
        %v829 = vshrl.u32 %v828, 7
        %v830 = vsub.s32 0, %v829
        %v831 = vrot.slane %v673, %v830
        %v837 = vunpack.c.l.b16 %v823
        %v838 = vunpack.c.l.b16 %v824
        %v839 = vunpack.c.l.b16 %v825
        %v840 = vunpack.c.l.b16 %v826
        %v841 = vpack.c.b16 %v838, %v837
        %v842 = vpack.c.b16 %v840, %v839
        %845 = vmatprep.subr.bf16.mxu0 0
        %846 = vmatpush1.bf16.msra.mxu0 %v841
        %847 = vmatprep.subr.bf16.mxu0 0
        %848 = vmatpush1.bf16.msra.mxu0 %v842
        %849 = vmatprep.subr.bf16.mxu0 0
        %850 = vmatpush1.bf16.msra.mxu0 0
        %851 = vmatprep.subr.bf16.mxu0 0
        %852 = vmatpush1.bf16.msra.mxu0 0
        %853 = vmatprep.subr.bf16.mxu0 0
        %854 = vmatpush1.bf16.msra.mxu0 0
        %855 = vmatprep.subr.bf16.mxu0 0
        %856 = vmatpush1.bf16.msra.mxu0 0
        %857 = vmatprep.subr.bf16.mxu0 0
        %858 = vmatpush1.bf16.msra.mxu0 0
        %859 = vmatprep.subr.bf16.mxu0 0
        %860 = vmatpush1.bf16.msra.mxu0 0
        %861 = vmatprep.subr.bf16.mxu0 0
        %862 = vmatpush1.bf16.msra.mxu0 0
        %863 = vmatprep.subr.bf16.mxu0 0
        %864 = vmatpush1.bf16.msra.mxu0 0
        %865 = vmatprep.subr.bf16.mxu0 0
        %866 = vmatpush1.bf16.msra.mxu0 0
        %867 = vmatprep.subr.bf16.mxu0 0
        %868 = vmatpush1.bf16.msra.mxu0 0
        %869 = vmatprep.subr.bf16.mxu0 0
        %870 = vmatpush1.bf16.msra.mxu0 0
        %871 = vmatprep.subr.bf16.mxu0 0
        %872 = vmatpush1.bf16.msra.mxu0 0
        %873 = vmatprep.subr.bf16.mxu0 0
        %874 = vmatpush1.bf16.msra.mxu0 0
        %875 = vmatprep.subr.bf16.mxu0 0
        %876 = vmatpush1.bf16.msra.mxu0 0
        %877 = vmatprep.mubr.bf16.mxu0 0
        %878 = vmatmul.mubr.bf16.gmra.mrb[0].mxu0 %v716
        %v879 = vpop.f32.mrb[0].mxu0
        %v880 = vadd.f32 %v831, %v879
        %v881 = vpop.f32.mrb[0].mxu0
        %v882 = vpop.f32.mrb[0].mxu0
        %v883 = vpop.f32.mrb[0].mxu0
        %884 = vdwg.mxu0
        %v885 = vpack.c.bf16 %v880, %v880
        %vm886 = vcmask 64512
        %v888 = vsel %vm886, %v759, 0
        %v891 = vsel %vm886, %v822, 0
        %893 = vmatprep.subr.bf16.mxu0 0
        %894 = vmatpush1.bf16.xpose.msra.mxu0 %v891
        %895 = vmatprep.subr.bf16.mxu0 0
        %896 = vmatpush1.bf16.xpose.msra.mxu0 0
        %897 = vmatprep.subr.bf16.mxu0 0
        %898 = vmatpush1.bf16.xpose.msra.mxu0 0
        %899 = vmatprep.subr.bf16.mxu0 0
        %900 = vmatpush1.bf16.xpose.msra.mxu0 0
        %901 = vmatprep.subr.bf16.mxu0 0
        %902 = vmatpush1.bf16.xpose.msra.mxu0 0
        %903 = vmatprep.subr.bf16.mxu0 0
        %904 = vmatpush1.bf16.xpose.msra.mxu0 0
        %905 = vmatprep.subr.bf16.mxu0 0
        %906 = vmatpush1.bf16.xpose.msra.mxu0 0
        %907 = vmatprep.subr.bf16.mxu0 0
        %908 = vmatpush1.bf16.xpose.msra.mxu0 0
        %909 = vmatprep.subr.bf16.mxu0 0
        %910 = vmatpush1.bf16.xpose.msra.mxu0 0
        %911 = vmatprep.subr.bf16.mxu0 0
        %912 = vmatpush1.bf16.xpose.msra.mxu0 0
        %913 = vmatprep.subr.bf16.mxu0 0
        %914 = vmatpush1.bf16.xpose.msra.mxu0 0
        %915 = vmatprep.subr.bf16.mxu0 0
        %916 = vmatpush1.bf16.xpose.msra.mxu0 0
        %917 = vmatprep.subr.bf16.mxu0 0
        %918 = vmatpush1.bf16.xpose.msra.mxu0 0
        %919 = vmatprep.subr.bf16.mxu0 0
        %920 = vmatpush1.bf16.xpose.msra.mxu0 0
        %921 = vmatprep.subr.bf16.mxu0 0
        %922 = vmatpush1.bf16.xpose.msra.mxu0 0
        %923 = vmatprep.subr.bf16.mxu0 0
        %924 = vmatpush1.bf16.xpose.msra.mxu0 0
        %925 = vmatprep.mubr.bf16.mxu0 0
        %926 = vmatmul.mubr.bf16.gmra.mrb[0].mxu0 %v888
        %v927 = vpop.f32.mrb[0].mxu0
        %v928 = vadd.f32 %v690, %v927
        %v929 = vpop.f32.mrb[0].mxu0
        %v930 = vpop.f32.mrb[0].mxu0
        %v931 = vpop.f32.mrb[0].mxu0
        %932 = vdwg.mxu0
        %v933 = vsel %vm886, %v928, -inf
        %934 = vmax.xlane.f32.xlu0 %v933
        %v935 = vpop.xlane.xlu0 %934
        %v936 = vsub.f32 %v928, %v935
        %v937 = vmul.f32 %v936, 1.442695
        %v938 = vpow.pop %v937
        %v939 = vsel %vm886, %v938, 0.0
        %940 = vadd.xlane.f32.xlu0 %v939
        %v941 = vpop.xlane.xlu0 %940
        %v942 = vrcp.pop %v941
        %v943 = vmul.f32 %v938, %v942
        %v944 = vpack.c.bf16 %v943, %v943
        %v946 = vsel %vm886, %v944, 0
        %vm948 = vcmask 1043456
        %v950 = vsel %vm948, %v885, 0
        %952 = vmatprep.subr.bf16.mxu0 0
        %953 = vmatpush1.bf16.msra.mxu0 %v950
        %954 = vmatprep.subr.bf16.mxu0 0
        %955 = vmatpush1.bf16.msra.mxu0 0
        %956 = vmatprep.subr.bf16.mxu0 0
        %957 = vmatpush1.bf16.msra.mxu0 0
        %958 = vmatprep.subr.bf16.mxu0 0
        %959 = vmatpush1.bf16.msra.mxu0 0
        %960 = vmatprep.subr.bf16.mxu0 0
        %961 = vmatpush1.bf16.msra.mxu0 0
        %962 = vmatprep.subr.bf16.mxu0 0
        %963 = vmatpush1.bf16.msra.mxu0 0
        %964 = vmatprep.subr.bf16.mxu0 0
        %965 = vmatpush1.bf16.msra.mxu0 0
        %966 = vmatprep.subr.bf16.mxu0 0
        %967 = vmatpush1.bf16.msra.mxu0 0
        %968 = vmatprep.subr.bf16.mxu0 0
        %969 = vmatpush1.bf16.msra.mxu0 0
        %970 = vmatprep.subr.bf16.mxu0 0
        %971 = vmatpush1.bf16.msra.mxu0 0
        %972 = vmatprep.subr.bf16.mxu0 0
        %973 = vmatpush1.bf16.msra.mxu0 0
        %974 = vmatprep.subr.bf16.mxu0 0
        %975 = vmatpush1.bf16.msra.mxu0 0
        %976 = vmatprep.subr.bf16.mxu0 0
        %977 = vmatpush1.bf16.msra.mxu0 0
        %978 = vmatprep.subr.bf16.mxu0 0
        %979 = vmatpush1.bf16.msra.mxu0 0
        %980 = vmatprep.subr.bf16.mxu0 0
        %981 = vmatpush1.bf16.msra.mxu0 0
        %982 = vmatprep.subr.bf16.mxu0 0
        %983 = vmatpush1.bf16.msra.mxu0 0
        %984 = vmatprep.mubr.bf16.mxu0 0
        %985 = vmatmul.mubr.bf16.gmra.mrb[0].mxu0 %v946
        %v986 = vpop.f32.mrb[0].mxu0
        %v987 = vadd.f32 0.0, %v986
        %v988 = vpop.f32.mrb[0].mxu0
        %v989 = vpop.f32.mrb[0].mxu0
        %v990 = vpop.f32.mrb[0].mxu0
        %991 = vdwg.mxu0
        %v992 = vpack.c.bf16 %v987, %v987
        %vm993 = vcmask 60416
        %994 = vst.msk [vmem:[#allocation2] sm:$0xf] %vm993, %v992
        %996 = vrot.lane.b32.xlu0 %v759, 120
        %v997 = vpop.permute.xlu0 %996
        %999 = vrot.lane.b32.xlu0 %v822, 120
        %v1000 = vpop.permute.xlu0 %999
        %v1002 = vsel %vm886, %v997, 0
        %v1005 = vsel %vm886, %v1000, 0
        %1007 = vmatprep.subr.bf16.mxu0 0
        %1008 = vmatpush1.bf16.xpose.msra.mxu0 %v1005
        %1009 = vmatprep.subr.bf16.mxu0 0
        %1010 = vmatpush1.bf16.xpose.msra.mxu0 0
        %1011 = vmatprep.subr.bf16.mxu0 0
        %1012 = vmatpush1.bf16.xpose.msra.mxu0 0
        %1013 = vmatprep.subr.bf16.mxu0 0
        %1014 = vmatpush1.bf16.xpose.msra.mxu0 0
        %1015 = vmatprep.subr.bf16.mxu0 0
        %1016 = vmatpush1.bf16.xpose.msra.mxu0 0
        %1017 = vmatprep.subr.bf16.mxu0 0
        %1018 = vmatpush1.bf16.xpose.msra.mxu0 0
        %1019 = vmatprep.subr.bf16.mxu0 0
        %1020 = vmatpush1.bf16.xpose.msra.mxu0 0
        %1021 = vmatprep.subr.bf16.mxu0 0
        %1022 = vmatpush1.bf16.xpose.msra.mxu0 0
        %1023 = vmatprep.subr.bf16.mxu0 0
        %1024 = vmatpush1.bf16.xpose.msra.mxu0 0
        %1025 = vmatprep.subr.bf16.mxu0 0
        %1026 = vmatpush1.bf16.xpose.msra.mxu0 0
        %1027 = vmatprep.subr.bf16.mxu0 0
        %1028 = vmatpush1.bf16.xpose.msra.mxu0 0
        %1029 = vmatprep.subr.bf16.mxu0 0
        %1030 = vmatpush1.bf16.xpose.msra.mxu0 0
        %1031 = vmatprep.subr.bf16.mxu0 0
        %1032 = vmatpush1.bf16.xpose.msra.mxu0 0
        %1033 = vmatprep.subr.bf16.mxu0 0
        %1034 = vmatpush1.bf16.xpose.msra.mxu0 0
        %1035 = vmatprep.subr.bf16.mxu0 0
        %1036 = vmatpush1.bf16.xpose.msra.mxu0 0
        %1037 = vmatprep.subr.bf16.mxu0 0
        %1038 = vmatpush1.bf16.xpose.msra.mxu0 0
        %1039 = vmatprep.mubr.bf16.mxu0 0
        %1040 = vmatmul.mubr.bf16.gmra.mrb[0].mxu0 %v1002
        %v1041 = vpop.f32.mrb[0].mxu0
        %v1042 = vadd.f32 %v690, %v1041
        %v1043 = vpop.f32.mrb[0].mxu0
        %v1044 = vpop.f32.mrb[0].mxu0
        %v1045 = vpop.f32.mrb[0].mxu0
        %1046 = vdwg.mxu0
        %v1047 = vsel %vm886, %v1042, -inf
        %1048 = vmax.xlane.f32.xlu0 %v1047
        %v1049 = vpop.xlane.xlu0 %1048
        %v1050 = vsub.f32 %v1042, %v1049
        %v1051 = vmul.f32 %v1050, 1.442695
        %v1052 = vpow.pop %v1051
        %v1053 = vsel %vm886, %v1052, 0.0
        %1054 = vadd.xlane.f32.xlu0 %v1053
        %v1055 = vpop.xlane.xlu0 %1054
        %v1056 = vrcp.pop %v1055
        %v1057 = vmul.f32 %v1052, %v1056
        %v1058 = vpack.c.bf16 %v1057, %v1057
        %1060 = vrot.lane.b32.xlu0 %v885, 120
        %v1061 = vpop.permute.xlu0 %1060
        %v1063 = vsel %vm886, %v1058, 0
        %v1066 = vsel %vm948, %v1061, 0
        %1068 = vmatprep.subr.bf16.mxu0 0
        %1069 = vmatpush1.bf16.msra.mxu0 %v1066
        %1070 = vmatprep.subr.bf16.mxu0 0
        %1071 = vmatpush1.bf16.msra.mxu0 0
        %1072 = vmatprep.subr.bf16.mxu0 0
        %1073 = vmatpush1.bf16.msra.mxu0 0
        %1074 = vmatprep.subr.bf16.mxu0 0
        %1075 = vmatpush1.bf16.msra.mxu0 0
        %1076 = vmatprep.subr.bf16.mxu0 0
        %1077 = vmatpush1.bf16.msra.mxu0 0
        %1078 = vmatprep.subr.bf16.mxu0 0
        %1079 = vmatpush1.bf16.msra.mxu0 0
        %1080 = vmatprep.subr.bf16.mxu0 0
        %1081 = vmatpush1.bf16.msra.mxu0 0
        %1082 = vmatprep.subr.bf16.mxu0 0
        %1083 = vmatpush1.bf16.msra.mxu0 0
        %1084 = vmatprep.subr.bf16.mxu0 0
        %1085 = vmatpush1.bf16.msra.mxu0 0
        %1086 = vmatprep.subr.bf16.mxu0 0
        %1087 = vmatpush1.bf16.msra.mxu0 0
        %1088 = vmatprep.subr.bf16.mxu0 0
        %1089 = vmatpush1.bf16.msra.mxu0 0
        %1090 = vmatprep.subr.bf16.mxu0 0
        %1091 = vmatpush1.bf16.msra.mxu0 0
        %1092 = vmatprep.subr.bf16.mxu0 0
        %1093 = vmatpush1.bf16.msra.mxu0 0
        %1094 = vmatprep.subr.bf16.mxu0 0
        %1095 = vmatpush1.bf16.msra.mxu0 0
        %1096 = vmatprep.subr.bf16.mxu0 0
        %1097 = vmatpush1.bf16.msra.mxu0 0
        %1098 = vmatprep.subr.bf16.mxu0 0
        %1099 = vmatpush1.bf16.msra.mxu0 0
        %1100 = vmatprep.mubr.bf16.mxu0 0
        %1101 = vmatmul.mubr.bf16.gmra.mrb[0].mxu0 %v1063
        %v1102 = vpop.f32.mrb[0].mxu0
        %v1103 = vadd.f32 0.0, %v1102
        %v1104 = vpop.f32.mrb[0].mxu0
        %v1105 = vpop.f32.mrb[0].mxu0
        %v1106 = vpop.f32.mrb[0].mxu0
        %1107 = vdwg.mxu0
        %v1108 = vpack.c.bf16 %v1103, %v1103
        %v1110 = vunpack.c.l.b16 %v1108
        %v1111 = vpack.c.b16 %v1110, %v1110
        %1112 = vrot.lane.b32.xlu0 %v1111, 8
        %v1113 = vpop.permute.xlu0 %1112
        %vm1115 = vcmask 126016
        %1116 = vst.msk [vmem:[#allocation2] sm:$0xf] %vm1115, %v1113
        %1117 = vrot.lane.b32.xlu0 %v759, 112
        %v1118 = vpop.permute.xlu0 %1117
        %1119 = vrot.lane.b32.xlu0 %v822, 112
        %v1120 = vpop.permute.xlu0 %1119
        %v1122 = vsel %vm886, %v1118, 0
        %v1125 = vsel %vm886, %v1120, 0
        %1127 = vmatprep.subr.bf16.mxu0 0
        %1128 = vmatpush1.bf16.xpose.msra.mxu0 %v1125
        %1129 = vmatprep.subr.bf16.mxu0 0
        %1130 = vmatpush1.bf16.xpose.msra.mxu0 0
        %1131 = vmatprep.subr.bf16.mxu0 0
        %1132 = vmatpush1.bf16.xpose.msra.mxu0 0
        %1133 = vmatprep.subr.bf16.mxu0 0
        %1134 = vmatpush1.bf16.xpose.msra.mxu0 0
        %1135 = vmatprep.subr.bf16.mxu0 0
        %1136 = vmatpush1.bf16.xpose.msra.mxu0 0
        %1137 = vmatprep.subr.bf16.mxu0 0
        %1138 = vmatpush1.bf16.xpose.msra.mxu0 0
        %1139 = vmatprep.subr.bf16.mxu0 0
        %1140 = vmatpush1.bf16.xpose.msra.mxu0 0
        %1141 = vmatprep.subr.bf16.mxu0 0
        %1142 = vmatpush1.bf16.xpose.msra.mxu0 0
        %1143 = vmatprep.subr.bf16.mxu0 0
        %1144 = vmatpush1.bf16.xpose.msra.mxu0 0
        %1145 = vmatprep.subr.bf16.mxu0 0
        %1146 = vmatpush1.bf16.xpose.msra.mxu0 0
        %1147 = vmatprep.subr.bf16.mxu0 0
        %1148 = vmatpush1.bf16.xpose.msra.mxu0 0
        %1149 = vmatprep.subr.bf16.mxu0 0
        %1150 = vmatpush1.bf16.xpose.msra.mxu0 0
        %1151 = vmatprep.subr.bf16.mxu0 0
        %1152 = vmatpush1.bf16.xpose.msra.mxu0 0
        %1153 = vmatprep.subr.bf16.mxu0 0
        %1154 = vmatpush1.bf16.xpose.msra.mxu0 0
        %1155 = vmatprep.subr.bf16.mxu0 0
        %1156 = vmatpush1.bf16.xpose.msra.mxu0 0
        %1157 = vmatprep.subr.bf16.mxu0 0
        %1158 = vmatpush1.bf16.xpose.msra.mxu0 0
        %1159 = vmatprep.mubr.bf16.mxu0 0
        %1160 = vmatmul.mubr.bf16.gmra.mrb[0].mxu0 %v1122
        %v1161 = vpop.f32.mrb[0].mxu0
        %v1162 = vadd.f32 %v690, %v1161
        %v1163 = vpop.f32.mrb[0].mxu0
        %v1164 = vpop.f32.mrb[0].mxu0
        %v1165 = vpop.f32.mrb[0].mxu0
        %1166 = vdwg.mxu0
        %v1167 = vsel %vm886, %v1162, -inf
        %1168 = vmax.xlane.f32.xlu0 %v1167
        %v1169 = vpop.xlane.xlu0 %1168
        %v1170 = vsub.f32 %v1162, %v1169
        %v1171 = vmul.f32 %v1170, 1.442695
        %v1172 = vpow.pop %v1171
        %v1173 = vsel %vm886, %v1172, 0.0
        %1174 = vadd.xlane.f32.xlu0 %v1173
        %v1175 = vpop.xlane.xlu0 %1174
        %v1176 = vrcp.pop %v1175
        %v1177 = vmul.f32 %v1172, %v1176
        %v1178 = vpack.c.bf16 %v1177, %v1177
        %1179 = vrot.lane.b32.xlu0 %v885, 112
        %v1180 = vpop.permute.xlu0 %1179
        %v1182 = vsel %vm886, %v1178, 0
        %v1185 = vsel %vm948, %v1180, 0
        %1187 = vmatprep.subr.bf16.mxu0 0
        %1188 = vmatpush1.bf16.msra.mxu0 %v1185
        %1189 = vmatprep.subr.bf16.mxu0 0
        %1190 = vmatpush1.bf16.msra.mxu0 0
        %1191 = vmatprep.subr.bf16.mxu0 0
        %1192 = vmatpush1.bf16.msra.mxu0 0
        %1193 = vmatprep.subr.bf16.mxu0 0
        %1194 = vmatpush1.bf16.msra.mxu0 0
        %1195 = vmatprep.subr.bf16.mxu0 0
        %1196 = vmatpush1.bf16.msra.mxu0 0
        %1197 = vmatprep.subr.bf16.mxu0 0
        %1198 = vmatpush1.bf16.msra.mxu0 0
        %1199 = vmatprep.subr.bf16.mxu0 0
        %1200 = vmatpush1.bf16.msra.mxu0 0
        %1201 = vmatprep.subr.bf16.mxu0 0
        %1202 = vmatpush1.bf16.msra.mxu0 0
        %1203 = vmatprep.subr.bf16.mxu0 0
        %1204 = vmatpush1.bf16.msra.mxu0 0
        %1205 = vmatprep.subr.bf16.mxu0 0
        %1206 = vmatpush1.bf16.msra.mxu0 0
        %1207 = vmatprep.subr.bf16.mxu0 0
        %1208 = vmatpush1.bf16.msra.mxu0 0
        %1209 = vmatprep.subr.bf16.mxu0 0
        %1210 = vmatpush1.bf16.msra.mxu0 0
        %1211 = vmatprep.subr.bf16.mxu0 0
        %1212 = vmatpush1.bf16.msra.mxu0 0
        %1213 = vmatprep.subr.bf16.mxu0 0
        %1214 = vmatpush1.bf16.msra.mxu0 0
        %1215 = vmatprep.subr.bf16.mxu0 0
        %1216 = vmatpush1.bf16.msra.mxu0 0
        %1217 = vmatprep.subr.bf16.mxu0 0
        %1218 = vmatpush1.bf16.msra.mxu0 0
        %1219 = vmatprep.mubr.bf16.mxu0 0
        %1220 = vmatmul.mubr.bf16.gmra.mrb[0].mxu0 %v1182
        %v1221 = vpop.f32.mrb[0].mxu0
        %v1222 = vadd.f32 0.0, %v1221
        %v1223 = vpop.f32.mrb[0].mxu0
        %v1224 = vpop.f32.mrb[0].mxu0
        %v1225 = vpop.f32.mrb[0].mxu0
        %1226 = vdwg.mxu0
        %v1227 = vpack.c.bf16 %v1222, %v1222
        %v1229 = vunpack.c.l.b16 %v1227
        %v1230 = vpack.c.b16 %v1229, %v1229
        %1231 = vrot.lane.b32.xlu0 %v1230, 16
        %v1232 = vpop.permute.xlu0 %1231
        %vm1234 = vcmask 191616
        %1235 = vst.msk [vmem:[#allocation2] sm:$0xf] %vm1234, %v1232
        %1236 = vrot.lane.b32.xlu0 %v759, 104
        %v1237 = vpop.permute.xlu0 %1236
        %1238 = vrot.lane.b32.xlu0 %v822, 104
        %v1239 = vpop.permute.xlu0 %1238
        %v1241 = vsel %vm886, %v1237, 0
        %v1244 = vsel %vm886, %v1239, 0
        %1246 = vmatprep.subr.bf16.mxu0 0
        %1247 = vmatpush1.bf16.xpose.msra.mxu0 %v1244
        %1248 = vmatprep.subr.bf16.mxu0 0
        %1249 = vmatpush1.bf16.xpose.msra.mxu0 0
        %1250 = vmatprep.subr.bf16.mxu0 0
        %1251 = vmatpush1.bf16.xpose.msra.mxu0 0
        %1252 = vmatprep.subr.bf16.mxu0 0
        %1253 = vmatpush1.bf16.xpose.msra.mxu0 0
        %1254 = vmatprep.subr.bf16.mxu0 0
        %1255 = vmatpush1.bf16.xpose.msra.mxu0 0
        %1256 = vmatprep.subr.bf16.mxu0 0
        %1257 = vmatpush1.bf16.xpose.msra.mxu0 0
        %1258 = vmatprep.subr.bf16.mxu0 0
        %1259 = vmatpush1.bf16.xpose.msra.mxu0 0
        %1260 = vmatprep.subr.bf16.mxu0 0
        %1261 = vmatpush1.bf16.xpose.msra.mxu0 0
        %1262 = vmatprep.subr.bf16.mxu0 0
        %1263 = vmatpush1.bf16.xpose.msra.mxu0 0
        %1264 = vmatprep.subr.bf16.mxu0 0
        %1265 = vmatpush1.bf16.xpose.msra.mxu0 0
        %1266 = vmatprep.subr.bf16.mxu0 0
        %1267 = vmatpush1.bf16.xpose.msra.mxu0 0
        %1268 = vmatprep.subr.bf16.mxu0 0
        %1269 = vmatpush1.bf16.xpose.msra.mxu0 0
        %1270 = vmatprep.subr.bf16.mxu0 0
        %1271 = vmatpush1.bf16.xpose.msra.mxu0 0
        %1272 = vmatprep.subr.bf16.mxu0 0
        %1273 = vmatpush1.bf16.xpose.msra.mxu0 0
        %1274 = vmatprep.subr.bf16.mxu0 0
        %1275 = vmatpush1.bf16.xpose.msra.mxu0 0
        %1276 = vmatprep.subr.bf16.mxu0 0
        %1277 = vmatpush1.bf16.xpose.msra.mxu0 0
        %1278 = vmatprep.mubr.bf16.mxu0 0
        %1279 = vmatmul.mubr.bf16.gmra.mrb[0].mxu0 %v1241
        %v1280 = vpop.f32.mrb[0].mxu0
        %v1281 = vadd.f32 %v690, %v1280
        %v1282 = vpop.f32.mrb[0].mxu0
        %v1283 = vpop.f32.mrb[0].mxu0
        %v1284 = vpop.f32.mrb[0].mxu0
        %1285 = vdwg.mxu0
        %v1286 = vsel %vm886, %v1281, -inf
        %1287 = vmax.xlane.f32.xlu0 %v1286
        %v1288 = vpop.xlane.xlu0 %1287
        %v1289 = vsub.f32 %v1281, %v1288
        %v1290 = vmul.f32 %v1289, 1.442695
        %v1291 = vpow.pop %v1290
        %v1292 = vsel %vm886, %v1291, 0.0
        %1293 = vadd.xlane.f32.xlu0 %v1292
        %v1294 = vpop.xlane.xlu0 %1293
        %v1295 = vrcp.pop %v1294
        %v1296 = vmul.f32 %v1291, %v1295
        %v1297 = vpack.c.bf16 %v1296, %v1296
        %1298 = vrot.lane.b32.xlu0 %v885, 104
        %v1299 = vpop.permute.xlu0 %1298
        %v1301 = vsel %vm886, %v1297, 0
        %v1304 = vsel %vm948, %v1299, 0
        %1306 = vmatprep.subr.bf16.mxu0 0
        %1307 = vmatpush1.bf16.msra.mxu0 %v1304
        %1308 = vmatprep.subr.bf16.mxu0 0
        %1309 = vmatpush1.bf16.msra.mxu0 0
        %1310 = vmatprep.subr.bf16.mxu0 0
        %1311 = vmatpush1.bf16.msra.mxu0 0
        %1312 = vmatprep.subr.bf16.mxu0 0
        %1313 = vmatpush1.bf16.msra.mxu0 0
        %1314 = vmatprep.subr.bf16.mxu0 0
        %1315 = vmatpush1.bf16.msra.mxu0 0
        %1316 = vmatprep.subr.bf16.mxu0 0
        %1317 = vmatpush1.bf16.msra.mxu0 0
        %1318 = vmatprep.subr.bf16.mxu0 0
        %1319 = vmatpush1.bf16.msra.mxu0 0
        %1320 = vmatprep.subr.bf16.mxu0 0
        %1321 = vmatpush1.bf16.msra.mxu0 0
        %1322 = vmatprep.subr.bf16.mxu0 0
        %1323 = vmatpush1.bf16.msra.mxu0 0
        %1324 = vmatprep.subr.bf16.mxu0 0
        %1325 = vmatpush1.bf16.msra.mxu0 0
        %1326 = vmatprep.subr.bf16.mxu0 0
        %1327 = vmatpush1.bf16.msra.mxu0 0
        %1328 = vmatprep.subr.bf16.mxu0 0
        %1329 = vmatpush1.bf16.msra.mxu0 0
        %1330 = vmatprep.subr.bf16.mxu0 0
        %1331 = vmatpush1.bf16.msra.mxu0 0
        %1332 = vmatprep.subr.bf16.mxu0 0
        %1333 = vmatpush1.bf16.msra.mxu0 0
        %1334 = vmatprep.subr.bf16.mxu0 0
        %1335 = vmatpush1.bf16.msra.mxu0 0
        %1336 = vmatprep.subr.bf16.mxu0 0
        %1337 = vmatpush1.bf16.msra.mxu0 0
        %1338 = vmatprep.mubr.bf16.mxu0 0
        %1339 = vmatmul.mubr.bf16.gmra.mrb[0].mxu0 %v1301
        %v1340 = vpop.f32.mrb[0].mxu0
        %v1341 = vadd.f32 0.0, %v1340
        %v1342 = vpop.f32.mrb[0].mxu0
        %v1343 = vpop.f32.mrb[0].mxu0
        %v1344 = vpop.f32.mrb[0].mxu0
        %1345 = vdwg.mxu0
        %v1346 = vpack.c.bf16 %v1341, %v1341
        %v1348 = vunpack.c.l.b16 %v1346
        %v1349 = vpack.c.b16 %v1348, %v1348
        %1350 = vrot.lane.b32.xlu0 %v1349, 24
        %v1351 = vpop.permute.xlu0 %1350
        %vm1353 = vcmask 257216
        %1354 = vst.msk [vmem:[#allocation2] sm:$0xf] %vm1353, %v1351
        %v1355 = vld [vmem:[#allocation2] sm:$0xf]
        %v1356 = vld [vmem:[#allocation11] sm:$0xf]
        %v1357 = vld [vmem:[#allocation11 + $0x4] sm:$0xf]
        %v1358 = vld [vmem:[#allocation11 + $0x8] sm:$0xf]
        %v1359 = vld [vmem:[#allocation11 + $0xc] sm:$0xf]
        %v1361 = vlaneseq
        %v1362 = vshrl.u32 %v1361, 7
        %v1363 = vsub.s32 0, %v1362
        %v1364 = vrot.slane %v674, %v1363
        %v1370 = vunpack.c.l.b16 %v1356
        %v1371 = vunpack.c.l.b16 %v1357
        %v1372 = vunpack.c.l.b16 %v1358
        %v1373 = vunpack.c.l.b16 %v1359
        %v1374 = vpack.c.b16 %v1371, %v1370
        %v1375 = vpack.c.b16 %v1373, %v1372
        %v1379 = vsel %vm714, %v1355, 0
        %1381 = vmatprep.subr.bf16.mxu0 0
        %1382 = vmatpush1.bf16.msra.mxu0 %v1374
        %1383 = vmatprep.subr.bf16.mxu0 0
        %1384 = vmatpush1.bf16.msra.mxu0 %v1375
        %1385 = vmatprep.subr.bf16.mxu0 0
        %1386 = vmatpush1.bf16.msra.mxu0 0
        %1387 = vmatprep.subr.bf16.mxu0 0
        %1388 = vmatpush1.bf16.msra.mxu0 0
        %1389 = vmatprep.subr.bf16.mxu0 0
        %1390 = vmatpush1.bf16.msra.mxu0 0
        %1391 = vmatprep.subr.bf16.mxu0 0
        %1392 = vmatpush1.bf16.msra.mxu0 0
        %1393 = vmatprep.subr.bf16.mxu0 0
        %1394 = vmatpush1.bf16.msra.mxu0 0
        %1395 = vmatprep.subr.bf16.mxu0 0
        %1396 = vmatpush1.bf16.msra.mxu0 0
        %1397 = vmatprep.subr.bf16.mxu0 0
        %1398 = vmatpush1.bf16.msra.mxu0 0
        %1399 = vmatprep.subr.bf16.mxu0 0
        %1400 = vmatpush1.bf16.msra.mxu0 0
        %1401 = vmatprep.subr.bf16.mxu0 0
        %1402 = vmatpush1.bf16.msra.mxu0 0
        %1403 = vmatprep.subr.bf16.mxu0 0
        %1404 = vmatpush1.bf16.msra.mxu0 0
        %1405 = vmatprep.subr.bf16.mxu0 0
        %1406 = vmatpush1.bf16.msra.mxu0 0
        %1407 = vmatprep.subr.bf16.mxu0 0
        %1408 = vmatpush1.bf16.msra.mxu0 0
        %1409 = vmatprep.subr.bf16.mxu0 0
        %1410 = vmatpush1.bf16.msra.mxu0 0
        %1411 = vmatprep.subr.bf16.mxu0 0
        %1412 = vmatpush1.bf16.msra.mxu0 0
        %1413 = vmatprep.mubr.bf16.mxu0 0
        %1414 = vmatmul.mubr.bf16.gmra.mrb[0].mxu0 %v1379
        %v1415 = vpop.f32.mrb[0].mxu0
        %v1416 = vadd.f32 %v1364, %v1415
        %v1417 = vpop.f32.mrb[0].mxu0
        %v1418 = vpop.f32.mrb[0].mxu0
        %v1419 = vpop.f32.mrb[0].mxu0
        %1420 = vdwg.mxu0
        %v1421 = vadd.f32 %v682, %v1416
        %v1422 = vsel %vm714, %v1421, 0.0
        %1423 = vadd.xlane.f32.xlu0 %v1422
        %v1424 = vpop.xlane.xlu0 %1423
        %v1425 = vrcp.pop 32.0
        %v1426 = vmul.f32 %v1424, %v1425
        %v1427 = vsub.f32 %v1421, %v1426
        %v1428 = vmul.f32 %v1427, %v1427
        %v1429 = vsel %vm714, %v1428, 0.0
        %1430 = vadd.xlane.f32.xlu0 %v1429
        %v1431 = vpop.xlane.xlu0 %1430
        %v1432 = vmul.f32 %v1431, %v1425
        %v1433 = vadd.f32 %v1432, 1e-12
        %v1434 = vrsqrt.pop %v1433
        %v1435 = vmul.f32 %v1427, %v1434
        %v1437 = vlaneseq
        %v1438 = vshrl.u32 %v1437, 7
        %v1439 = vsub.s32 0, %v1438
        %v1440 = vrot.slane %v677, %v1439
        %v1442 = vmul.f32 %v1435, %v1440
        %v1444 = vlaneseq
        %v1445 = vshrl.u32 %v1444, 7
        %v1446 = vsub.s32 0, %v1445
        %v1447 = vrot.slane %v678, %v1446
        %v1449 = vadd.f32 %v1442, %v1447
        %v1450 = vpack.c.bf16 %v1449, %v1449
        %v1451 = vld [vmem:[%s12] sm:$0xf]
        %v1452 = vld [vmem:[%s12 + $0x4] sm:$0xf]
        %v1453 = vld [vmem:[%s12 + $0x8] sm:$0xf]
        %v1454 = vld [vmem:[%s12 + $0xc] sm:$0xf]
        %v1456 = vlaneseq
        %v1457 = vshrl.u32 %v1456, 7
        %v1458 = vsub.s32 0, %v1457
        %v1459 = vrot.slane %v675, %v1458
        %v1465 = vunpack.c.l.b16 %v1451
        %v1466 = vunpack.c.l.b16 %v1452
        %v1467 = vunpack.c.l.b16 %v1453
        %v1468 = vunpack.c.l.b16 %v1454
        %v1469 = vpack.c.b16 %v1466, %v1465
        %v1470 = vpack.c.b16 %v1468, %v1467
        %v1474 = vsel %vm714, %v1450, 0
        %1476 = vmatprep.subr.bf16.mxu0 0
        %1477 = vmatpush1.bf16.msra.mxu0 %v1469
        %1478 = vmatprep.subr.bf16.mxu0 0
        %1479 = vmatpush1.bf16.msra.mxu0 %v1470
        %1480 = vmatprep.subr.bf16.mxu0 0
        %1481 = vmatpush1.bf16.msra.mxu0 0
        %1482 = vmatprep.subr.bf16.mxu0 0
        %1483 = vmatpush1.bf16.msra.mxu0 0
        %1484 = vmatprep.subr.bf16.mxu0 0
        %1485 = vmatpush1.bf16.msra.mxu0 0
        %1486 = vmatprep.subr.bf16.mxu0 0
        %1487 = vmatpush1.bf16.msra.mxu0 0
        %1488 = vmatprep.subr.bf16.mxu0 0
        %1489 = vmatpush1.bf16.msra.mxu0 0
        %1490 = vmatprep.subr.bf16.mxu0 0
        %1491 = vmatpush1.bf16.msra.mxu0 0
        %1492 = vmatprep.subr.bf16.mxu0 0
        %1493 = vmatpush1.bf16.msra.mxu0 0
        %1494 = vmatprep.subr.bf16.mxu0 0
        %1495 = vmatpush1.bf16.msra.mxu0 0
        %1496 = vmatprep.subr.bf16.mxu0 0
        %1497 = vmatpush1.bf16.msra.mxu0 0
        %1498 = vmatprep.subr.bf16.mxu0 0
        %1499 = vmatpush1.bf16.msra.mxu0 0
        %1500 = vmatprep.subr.bf16.mxu0 0
        %1501 = vmatpush1.bf16.msra.mxu0 0
        %1502 = vmatprep.subr.bf16.mxu0 0
        %1503 = vmatpush1.bf16.msra.mxu0 0
        %1504 = vmatprep.subr.bf16.mxu0 0
        %1505 = vmatpush1.bf16.msra.mxu0 0
        %1506 = vmatprep.subr.bf16.mxu0 0
        %1507 = vmatpush1.bf16.msra.mxu0 0
        %1508 = vmatprep.mubr.bf16.mxu0 0
        %1509 = vmatmul.mubr.bf16.gmra.mrb[0].mxu0 %v1474
        %v1510 = vpop.f32.mrb[0].mxu0
        %v1511 = vadd.f32 %v1459, %v1510
        %v1512 = vpop.f32.mrb[0].mxu0
        %v1513 = vpop.f32.mrb[0].mxu0
        %v1514 = vpop.f32.mrb[0].mxu0
        %1515 = vdwg.mxu0
        %v1516 = vmax.f32 %v1511, 0.0
        %v1517 = vpack.c.bf16 %v1516, %v1516
        %v1518 = vld [vmem:[%s14] sm:$0xf]
        %v1519 = vld [vmem:[%s14 + $0x4] sm:$0xf]
        %v1520 = vld [vmem:[%s14 + $0x8] sm:$0xf]
        %v1521 = vld [vmem:[%s14 + $0xc] sm:$0xf]
        %v1522 = vld [vmem:[%s14 + $0x10] sm:$0xf]
        %v1523 = vld [vmem:[%s14 + $0x14] sm:$0xf]
        %v1524 = vld [vmem:[%s14 + $0x18] sm:$0xf]
        %v1525 = vld [vmem:[%s14 + $0x1c] sm:$0xf]
        %v1527 = vlaneseq
        %v1528 = vshrl.u32 %v1527, 7
        %v1529 = vsub.s32 0, %v1528
        %v1530 = vrot.slane %v676, %v1529
        %v1540 = vunpack.c.l.b16 %v1518
        %v1541 = vunpack.c.l.b16 %v1519
        %v1542 = vunpack.c.l.b16 %v1520
        %v1543 = vunpack.c.l.b16 %v1521
        %v1544 = vunpack.c.l.b16 %v1522
        %v1545 = vunpack.c.l.b16 %v1523
        %v1546 = vunpack.c.l.b16 %v1524
        %v1547 = vunpack.c.l.b16 %v1525
        %v1548 = vpack.c.b16 %v1541, %v1540
        %v1549 = vpack.c.b16 %v1543, %v1542
        %v1550 = vpack.c.b16 %v1545, %v1544
        %v1551 = vpack.c.b16 %v1547, %v1546
        %vm1556 = vcmask 523264
        %v1558 = vsel %vm1556, %v1517, 0
        %1560 = vmatprep.subr.bf16.mxu0 0
        %1561 = vmatpush1.bf16.msra.mxu0 %v1548
        %1562 = vmatprep.subr.bf16.mxu0 0
        %1563 = vmatpush1.bf16.msra.mxu0 %v1549
        %1564 = vmatprep.subr.bf16.mxu0 0
        %1565 = vmatpush1.bf16.msra.mxu0 %v1550
        %1566 = vmatprep.subr.bf16.mxu0 0
        %1567 = vmatpush1.bf16.msra.mxu0 %v1551
        %1568 = vmatprep.subr.bf16.mxu0 0
        %1569 = vmatpush1.bf16.msra.mxu0 0
        %1570 = vmatprep.subr.bf16.mxu0 0
        %1571 = vmatpush1.bf16.msra.mxu0 0
        %1572 = vmatprep.subr.bf16.mxu0 0
        %1573 = vmatpush1.bf16.msra.mxu0 0
        %1574 = vmatprep.subr.bf16.mxu0 0
        %1575 = vmatpush1.bf16.msra.mxu0 0
        %1576 = vmatprep.subr.bf16.mxu0 0
        %1577 = vmatpush1.bf16.msra.mxu0 0
        %1578 = vmatprep.subr.bf16.mxu0 0
        %1579 = vmatpush1.bf16.msra.mxu0 0
        %1580 = vmatprep.subr.bf16.mxu0 0
        %1581 = vmatpush1.bf16.msra.mxu0 0
        %1582 = vmatprep.subr.bf16.mxu0 0
        %1583 = vmatpush1.bf16.msra.mxu0 0
        %1584 = vmatprep.subr.bf16.mxu0 0
        %1585 = vmatpush1.bf16.msra.mxu0 0
        %1586 = vmatprep.subr.bf16.mxu0 0
        %1587 = vmatpush1.bf16.msra.mxu0 0
        %1588 = vmatprep.subr.bf16.mxu0 0
        %1589 = vmatpush1.bf16.msra.mxu0 0
        %1590 = vmatprep.subr.bf16.mxu0 0
        %1591 = vmatpush1.bf16.msra.mxu0 0
        %1592 = vmatprep.mubr.bf16.mxu0 0
        %1593 = vmatmul.mubr.bf16.gmra.mrb[0].mxu0 %v1558
        %v1594 = vpop.f32.mrb[0].mxu0
        %v1595 = vadd.f32 %v1530, %v1594
        %v1596 = vpop.f32.mrb[0].mxu0
        %v1597 = vpop.f32.mrb[0].mxu0
        %v1598 = vpop.f32.mrb[0].mxu0
        %1599 = vdwg.mxu0
        %v1600 = vadd.f32 %v1449, %v1595
        %v1601 = vsel %vm714, %v1600, 0.0
        %1602 = vadd.xlane.f32.xlu0 %v1601
        %v1603 = vpop.xlane.xlu0 %1602
        %v1604 = vmul.f32 %v1603, %v1425
        %v1605 = vsub.f32 %v1600, %v1604
        %v1606 = vmul.f32 %v1605, %v1605
        %v1607 = vsel %vm714, %v1606, 0.0
        %1608 = vadd.xlane.f32.xlu0 %v1607
        %v1609 = vpop.xlane.xlu0 %1608
        %v1610 = vmul.f32 %v1609, %v1425
        %v1611 = vadd.f32 %v1610, 1e-12
        %v1612 = vrsqrt.pop %v1611
        %v1613 = vmul.f32 %v1605, %v1612
        %v1615 = vlaneseq
        %v1616 = vshrl.u32 %v1615, 7
        %v1617 = vsub.s32 0, %v1616
        %v1618 = vrot.slane %v679, %v1617
        %v1620 = vmul.f32 %v1613, %v1618
        %v1622 = vlaneseq
        %v1623 = vshrl.u32 %v1622, 7
        %v1624 = vsub.s32 0, %v1623
        %v1625 = vrot.slane %v680, %v1624
        %v1627 = vadd.f32 %v1620, %v1625
        %1628 = vst.msk [vmem:[%s666] sm:$0xff] %vm714, %v1627
        %s1629 = sand.u32 %s434, 1
        %s1630 = scalar_lea.sflag [#allocation5], %s1629
        %s1631 = sand.u32 %s434, 1
        %s1632 = smul.addr %s1631, 8
        %s1633 = scalar_lea.vmem [#allocation14], %s1632
        // Predicated region
        $region117: #{tpu_custom_call.1} parent=91 // pred_check
          %p1634 = pneg %p444
        $region118: #{tpu_custom_call.1} parent=91 // pred_check_branch
          %1636 = sbr.rel (%p1634) target = $region120
        $region119: #{tpu_custom_call.1} parent=91 // pred_region
          %s1638 = ssub.s32 128, 128
          %1639 = vsyncadd %s1630, %s1638
          %s1640 = smul.addr %s38, 128
          %s1641 = scalar_lea.hbm %s18, %s1640
          %s1643 = sshll.u32 %s1633, 4
          %s1644 = int_to_ptr.vmem [resolvable:$true] %s1643
          %1646 = dma.vmem_to_hbm [thread:$0]  %s1644, 128, %s1641, %s1630
        $region120: #{tpu_custom_call.1} parent=91 // pred_fallthru
          _
      $region92: #{tpu_custom_call.1} parent=5 // pred_fallthru
        _
      %p1647 = scmp.le.s32.totalorder 2, %s33
      // Predicated region
      $region121: #{tpu_custom_call.1} parent=5 // pred_check
        %p1648 = pneg %p1647
      $region122: #{tpu_custom_call.1} parent=5 // pred_check_branch
        %1650 = sbr.rel (%p1648) target = $region124
      $region123: #{tpu_custom_call.1} parent=5 // pred_region
        %s1651 = ssub.s32 %s33, 2
        // Predicated region
        $region125: #{tpu_custom_call.1} parent=123 // pred_check
          %p1652 = pneg %p450
        $region126: #{tpu_custom_call.1} parent=123 // pred_check_branch
          %1654 = sbr.rel (%p1652) target = $region128
        $region127: #{tpu_custom_call.1} parent=123 // pred_region
          %s1655 = sand.u32 %s435, 1
          %s1656 = scalar_lea.sflag [#allocation5], %s1655
          %s1657 = sand.u32 %s435, 1
          %s1658 = smul.addr %s1657, 8
          %s1659 = scalar_lea.vmem [#allocation14], %s1658
          %1660 = dma.done %s1656, 128
        $region128: #{tpu_custom_call.1} parent=123 // pred_fallthru
          _
      $region124: #{tpu_custom_call.1} parent=5 // pred_fallthru
        _
    $region6: #{tpu_custom_call.1} parent=1 // loop_footer
      %s37 = sadd.s32 1, %s33
    $region7: #{tpu_custom_call.1} parent=1 // loop_footer_branch
      %32 = sbr.rel target = $region3
    $region8: #{tpu_custom_call.1} parent=1 // loop_exit
      _
    %1661 = vsyncpa [#allocation4], 1
    %s1662 = scalar_lea.sflag [#allocation4], 1
    %1663 = vsyncpa %s1662, 1
    %1664 = vsyncpa [#allocation7], 1
    %1665 = vsyncpa [#allocation10], 1
    %1666 = vsyncpa [#allocation13], 1
    %1667 = vsyncpa [#allocation5], 1
    %s1668 = scalar_lea.sflag [#allocation5], 1
    %1669 = vsyncpa %s1668, 1

</llo_original>
